<compile_context>
chip_gen: v7x
topology: tpu7x:2x2x1
jax: 0.10.0
libtpu: 0.0.40
codegen_flags: <defaults>
</compile_context>

<pallas_src>
import jax
import jax.numpy as jnp
import numpy as np
from jax.experimental import pallas as pl
from jax.experimental.pallas import tpu as pltpu


# ----------------------------------------------------------------------------
# Helpers
# ----------------------------------------------------------------------------
def _round_up(x, m):
    return (x + m - 1) // m * m


def _pad_gate_cols(w, h, h_pad):
    """Pad the trailing 4*h gate dim to 4*h_pad, zero-padding each gate block."""
    lead = w.shape[:-1]
    w4 = w.reshape(lead + (4, h))
    cfg = [(0, 0)] * (len(lead) + 1) + [(0, h_pad - h)]
    return jnp.pad(w4, cfg).reshape(lead + (4 * h_pad,))


_VMEM_BUDGET = 16 << 20   # bytes used for chunk sizing (safe on v5e/v6e/v7x)
_VMEM_LIMIT = 32 << 20    # scoped VMEM limit requested from the compiler


def _pick_chunk(seq_len, tb, in_size, hp, op,
                budget_bytes=_VMEM_BUDGET, max_chunk=32):
    """Largest time chunk whose VMEM working set fits the budget."""
    # Resident weights + carries (assume weights double-buffered for safety).
    fixed = 8 * (in_size * 4 * hp + 4 * hp + hp * 4 * hp + hp * op + op) \
            + 8 * tb * hp
    # Per-timestep VMEM: x/y tiles double-buffered, gx/hs scratch, temp slack.
    per_t = 4 * tb * (2 * in_size + 2 * op + 4 * hp + hp) + 4 * tb * 4 * hp
    chunk = max(1, min(seq_len, max_chunk, (budget_bytes - fixed) // per_t))
    return int(chunk)


# ----------------------------------------------------------------------------
# Fused kernel: input-gates GEMM -> serial LSTM recurrence -> output projection.
# Grid = (batch_tiles [parallel], time_chunks [arbitrary, serial]).
# ----------------------------------------------------------------------------
def _fused_lstm_kernel(x_ref, w_comb_ref, b_comb_ref, w_hh_ref, w_out_ref,
                       b_out_ref, y_ref, h_scr, c_scr, gx_scr, hs_scr):
    chunk, tb, in_sz = x_ref.shape
    hp = h_scr.shape[1]
    op = y_ref.shape[-1]

    # Reset the h/c carry at the start of each batch tile's time sweep.
    @pl.when(pl.program_id(1) == 0)
    def _():
        h_scr[...] = jnp.zeros_like(h_scr)
        c_scr[...] = jnp.zeros_like(c_scr)

    # ---- input-side gates for the whole chunk: one lane-dense MXU GEMM -------
    x2d = x_ref[...].reshape(chunk * tb, in_sz)
    gx = jnp.dot(x2d, w_comb_ref[...], preferred_element_type=jnp.float32)
    gx_scr[...] = (gx + b_comb_ref[...]).reshape(chunk, tb, 4 * hp)

    w_hh = w_hh_ref[...]  # constant index_map -> DMA'd once, resident in VMEM

    # ---- serial recurrence: only h @ w_hh + gate elementwise math per step ---
    def step(t, carry):
        h, c = carry
        gates = gx_scr[t] + jnp.dot(h, w_hh, preferred_element_type=jnp.float32)
        i_g = jax.nn.sigmoid(gates[:, 0 * hp:1 * hp])
        f_g = jax.nn.sigmoid(gates[:, 1 * hp:2 * hp])
        g_g = jnp.tanh(gates[:, 2 * hp:3 * hp])
        o_g = jax.nn.sigmoid(gates[:, 3 * hp:4 * hp])
        c = f_g * c + i_g * g_g
        h = o_g * jnp.tanh(c)
        hs_scr[t] = h
        return (h, c)

    h, c = jax.lax.fori_loop(0, chunk, step, (h_scr[...], c_scr[...]),
                             unroll=True)
    h_scr[...] = h
    c_scr[...] = c

    # ---- output projection epilogue: lane-dense (op is a multiple of 128) ----
    hs2d = hs_scr[...].reshape(chunk * tb, hp)
    y = jnp.dot(hs2d, w_out_ref[...], preferred_element_type=jnp.float32)
    y_ref[...] = (y + b_out_ref[...]).reshape(chunk, tb, op).astype(y_ref.dtype)


# ----------------------------------------------------------------------------
# Full forward pass.
# ----------------------------------------------------------------------------
def sequence_model_forward(x, params):
    """x: (seq_len, batch, in_size) float32."""
    seq_len, batch, in_size = x.shape
    w_in, b_in, w_ih, w_hh, b_lstm, w_out, b_out = params
    H = w_in.shape[1]
    out_size = w_out.shape[1]

    # Fold linear_in into the LSTM input-side weights (exact: dropout = identity).
    w_comb = w_in @ w_ih                 # (in_size, 4H)
    b_comb = b_in @ w_ih + b_lstm        # (1, 4H)

    # Lane/sublane aligned padded dims.
    hp = _round_up(H, 128)               # whole-vreg gate slices, lane-dense hs
    op = _round_up(out_size, 128)        # unmasked output stores
    bp = _round_up(batch, 8)             # full sublane groups

    # v7x: split batch across the two TensorCores when it is big enough.
    n_btiles = 2 if (bp >= 16 and bp % 16 == 0) else 1
    tb = bp // n_btiles

    chunk = _pick_chunk(seq_len, tb, in_size, hp, op)
    sp = _round_up(seq_len, chunk)       # pad time instead of degrading to chunk=1

    # Pad params: per-gate column padding keeps the i|f|g|o blocks aligned;
    # padded hidden columns stay exactly zero through the recurrence.
    w_comb_p = _pad_gate_cols(w_comb, H, hp)                              # (in, 4hp)
    b_comb_p = _pad_gate_cols(b_comb, H, hp)                              # (1, 4hp)
    w_hh_p = jnp.pad(_pad_gate_cols(w_hh, H, hp), ((0, hp - H), (0, 0)))  # (hp, 4hp)
    w_out_p = jnp.pad(w_out, ((0, hp - H), (0, op - out_size)))           # (hp, op)
    b_out_p = jnp.pad(b_out, ((0, 0), (0, op - out_size)))                # (1, op)

    # Pad activations (trailing padded timesteps / batch rows are discarded).
    x_p = jnp.pad(x, ((0, sp - seq_len), (0, bp - batch), (0, 0)))

    cost = pl.CostEstimate(
        flops=int(2 * sp * bp * (in_size * 4 * hp + hp * 4 * hp + hp * op)),
        transcendentals=int(5 * sp * bp * hp),
        bytes_accessed=int(4 * (sp * bp * (in_size + op) + in_size * 4 * hp
                                + 4 * hp + hp * 4 * hp + hp * op + op)),
    )

    y_p = pl.pallas_call(
        _fused_lstm_kernel,
        out_shape=jax.ShapeDtypeStruct((sp, bp, op), jnp.float32),
        grid_spec=pltpu.PrefetchScalarGridSpec(
            num_scalar_prefetch=0,
            grid=(n_btiles, sp // chunk),
            in_specs=[
                pl.BlockSpec((chunk, tb, in_size), lambda b, n: (n, b, 0)),
                pl.BlockSpec((in_size, 4 * hp), lambda b, n: (0, 0)),
                pl.BlockSpec((1, 4 * hp), lambda b, n: (0, 0)),
                pl.BlockSpec((hp, 4 * hp), lambda b, n: (0, 0)),
                pl.BlockSpec((hp, op), lambda b, n: (0, 0)),
                pl.BlockSpec((1, op), lambda b, n: (0, 0)),
            ],
            out_specs=pl.BlockSpec((chunk, tb, op), lambda b, n: (n, b, 0)),
            scratch_shapes=[
                pltpu.VMEM((tb, hp), jnp.float32),             # h carry
                pltpu.VMEM((tb, hp), jnp.float32),             # c carry
                pltpu.VMEM((chunk, tb, 4 * hp), jnp.float32),  # input-side gates
                pltpu.VMEM((chunk, tb, hp), jnp.float32),      # chunk hidden states
            ],
        ),
        compiler_params=pltpu.CompilerParams(
            dimension_semantics=("parallel", "arbitrary"),  # time is serial
            vmem_limit_bytes=_VMEM_LIMIT,
        ),
        cost_estimate=cost,
    )(x_p, w_comb_p, b_comb_p, w_hh_p, w_out_p, b_out_p)

    return y_p[:seq_len, :batch, :out_size]


# ----------------------------------------------------------------------------
# Deterministic synthetic parameters (PyTorch-equivalent shapes, pre-transposed).
# ----------------------------------------------------------------------------
def make_params(key, in_size, hidden_size, out_size):
    ks = jax.random.split(key, 7)
    scale = 0.1
    w_in = scale * jax.random.normal(ks[0], (in_size, hidden_size), jnp.float32)
    b_in = scale * jax.random.normal(ks[1], (1, hidden_size), jnp.float32)
    # PyTorch weight_ih_l0 is (4H, H_in); we store the transpose (H_in, 4H).
    w_ih = scale * jax.random.normal(ks[2], (hidden_size, 4 * hidden_size), jnp.float32)
    w_hh = scale * jax.random.normal(ks[3], (hidden_size, 4 * hidden_size), jnp.float32)
    # b_ih + b_hh folded into a single bias row.
    b_lstm = scale * jax.random.normal(ks[4], (1, 4 * hidden_size), jnp.float32)
    w_out = scale * jax.random.normal(ks[5], (hidden_size, out_size), jnp.float32)
    b_out = scale * jax.random.normal(ks[6], (1, out_size), jnp.float32)
    return (w_in, b_in, w_ih, w_hh, b_lstm, w_out, b_out)


def reference_forward(x, params):
    """Pure-JAX reference (same math as the torch module in eval mode, no folding)."""
    w_in, b_in, w_ih, w_hh, b_lstm, w_out, b_out = params
    H = w_in.shape[1]
    xin = jnp.einsum('sbi,ih->sbh', x, w_in) + b_in  # dropout_in = identity

    def step(carry, x_t):
        h, c = carry
        gates = x_t @ w_ih + h @ w_hh + b_lstm       # PyTorch gate order: i, f, g, o
        i = jax.nn.sigmoid(gates[:, 0 * H:1 * H])
        f = jax.nn.sigmoid(gates[:, 1 * H:2 * H])
        g = jnp.tanh(gates[:, 2 * H:3 * H])
        o = jax.nn.sigmoid(gates[:, 3 * H:4 * H])
        c = f * c + i * g
        h = o * jnp.tanh(c)
        return (h, c), h

    batch = x.shape[1]
    init = (jnp.zeros((batch, H), jnp.float32), jnp.zeros((batch, H), jnp.float32))
    _, hs = jax.lax.scan(step, init, xin)
    return jnp.einsum('sbh,ho->sbo', hs, w_out) + b_out  # dropout_out = identity


if __name__ == "__main__":
    seq_len, batch, in_size, hidden_size, out_size = 8, 4, 8, 32, 4
    key = jax.random.PRNGKey(0)
    kx, kp = jax.random.split(key)
    x = jax.random.normal(kx, (seq_len, batch, in_size), jnp.float32)
    params = make_params(kp, in_size, hidden_size, out_size)

    fwd = jax.jit(sequence_model_forward)
    y = jax.block_until_ready(fwd(x, params))
    y_ref = jax.block_until_ready(reference_forward(x, params))
    np.testing.assert_allclose(np.asarray(y), np.asarray(y_ref), rtol=1e-5, atol=1e-5)

    print("KERNEL_OK")
</pallas_src>

<mosaic_0001>
module attributes {stable_mosaic.version = 11 : i64} {
  func.func @_fused_lstm_kernel(%arg0: i32, %arg1: i32, %arg2: memref<8x8x8xf32, #tpu.memory_space<vmem>>, %arg3: memref<8x512xf32, #tpu.memory_space<vmem>>, %arg4: memref<1x512xf32, #tpu.memory_space<vmem>>, %arg5: memref<128x512xf32, #tpu.memory_space<vmem>>, %arg6: memref<128x128xf32, #tpu.memory_space<vmem>>, %arg7: memref<1x128xf32, #tpu.memory_space<vmem>>, %arg8: memref<8x8x128xf32, #tpu.memory_space<vmem>>, %arg9: memref<8x128xf32, #tpu.memory_space<vmem>>, %arg10: memref<8x128xf32, #tpu.memory_space<vmem>>, %arg11: memref<8x8x512xf32, #tpu.memory_space<vmem>>, %arg12: memref<8x8x128xf32, #tpu.memory_space<vmem>>) attributes {dimension_semantics = [#tpu.dimension_semantics<parallel>, #tpu.dimension_semantics<arbitrary>], iteration_bounds = array<i64: 1, 1>, scalar_prefetch = 0 : i64, scratch_operands = 4 : i64, tpu.core_type = #tpu.core_type<tc>, window_params = [{transform_indices = @transform_0, window_bounds = array<i64: 8, 8, 8>}, {pipeline_mode = #tpu.pipeline_mode<synchronous>, transform_indices = @transform_1, window_bounds = array<i64: 8, 512>}, {pipeline_mode = #tpu.pipeline_mode<synchronous>, transform_indices = @transform_2, window_bounds = array<i64: 1, 512>}, {pipeline_mode = #tpu.pipeline_mode<synchronous>, transform_indices = @transform_3, window_bounds = array<i64: 128, 512>}, {pipeline_mode = #tpu.pipeline_mode<synchronous>, transform_indices = @transform_4, window_bounds = array<i64: 128, 128>}, {pipeline_mode = #tpu.pipeline_mode<synchronous>, transform_indices = @transform_5, window_bounds = array<i64: 1, 128>}, {transform_indices = @transform_6, window_bounds = array<i64: 8, 8, 128>}]} {
    %c0_i32 = arith.constant 0 : i32
    %0 = arith.cmpi eq, %arg1, %c0_i32 : i32
    %1 = arith.extui %0 : i1 to i32
    %c0_i32_0 = arith.constant 0 : i32
    %2 = arith.cmpi ne, %1, %c0_i32_0 : i32
    scf.if %2 {
      %cst_96 = arith.constant 0.000000e+00 : f32
      %298 = vector.broadcast %cst_96 : f32 to vector<8x128xf32>
      %c0_97 = arith.constant 0 : index
      %c0_98 = arith.constant 0 : index
      %299 = vector.load %arg9[%c0_97, %c0_98] : memref<8x128xf32, #tpu.memory_space<vmem>>, vector<8x128xf32>
      tpu.vector_store %arg9[%c0_97, %c0_98], %298 {strides = array<i32>} : memref<8x128xf32, #tpu.memory_space<vmem>>, vector<8x128xf32>,
      %cst_99 = arith.constant 0.000000e+00 : f32
      %300 = vector.broadcast %cst_99 : f32 to vector<8x128xf32>
      %c0_100 = arith.constant 0 : index
      %c0_101 = arith.constant 0 : index
      %301 = vector.load %arg10[%c0_100, %c0_101] : memref<8x128xf32, #tpu.memory_space<vmem>>, vector<8x128xf32>
      tpu.vector_store %arg10[%c0_100, %c0_101], %300 {strides = array<i32>} : memref<8x128xf32, #tpu.memory_space<vmem>>, vector<8x128xf32>,
    } else {
    }
    %c0 = arith.constant 0 : index
    %c0_1 = arith.constant 0 : index
    %c0_2 = arith.constant 0 : index
    %3 = vector.load %arg2[%c0, %c0_1, %c0_2] : memref<8x8x8xf32, #tpu.memory_space<vmem>>, vector<8x8x8xf32>
    %4 = vector.shape_cast %3 : vector<8x8x8xf32> to vector<64x8xf32>
    %c0_3 = arith.constant 0 : index
    %c0_4 = arith.constant 0 : index
    %5 = vector.load %arg3[%c0_3, %c0_4] : memref<8x512xf32, #tpu.memory_space<vmem>>, vector<8x512xf32>
    %cst = arith.constant dense<0.000000e+00> : vector<64x512xf32>
    %6 = tpu.matmul %4, %5, %cst {dimension_numbers = #tpu.dot_dimension_numbers<[1], [0], [0], [1], [0, 0, 1, 1], [], []>} : vector<64x8xf32>, vector<8x512xf32>, vector<64x512xf32> -> vector<64x512xf32>
    %c0_5 = arith.constant 0 : index
    %c0_6 = arith.constant 0 : index
    %7 = vector.load %arg4[%c0_5, %c0_6] : memref<1x512xf32, #tpu.memory_space<vmem>>, vector<1x512xf32>
    %8 = vector.broadcast %7 : vector<1x512xf32> to vector<64x512xf32>
    %9 = arith.addf %6, %8 : vector<64x512xf32>
    %10 = vector.shape_cast %9 : vector<64x512xf32> to vector<8x8x512xf32>
    %c0_7 = arith.constant 0 : index
    %c0_8 = arith.constant 0 : index
    %c0_9 = arith.constant 0 : index
    %11 = vector.load %arg11[%c0_7, %c0_8, %c0_9] : memref<8x8x512xf32, #tpu.memory_space<vmem>>, vector<8x8x512xf32>
    tpu.vector_store %arg11[%c0_7, %c0_8, %c0_9], %10 {strides = array<i32>} : memref<8x8x512xf32, #tpu.memory_space<vmem>>, vector<8x8x512xf32>,
    %c0_10 = arith.constant 0 : index
    %c0_11 = arith.constant 0 : index
    %12 = vector.load %arg5[%c0_10, %c0_11] : memref<128x512xf32, #tpu.memory_space<vmem>>, vector<128x512xf32>
    %c0_12 = arith.constant 0 : index
    %c0_13 = arith.constant 0 : index
    %13 = vector.load %arg9[%c0_12, %c0_13] : memref<8x128xf32, #tpu.memory_space<vmem>>, vector<8x128xf32>
    %c0_14 = arith.constant 0 : index
    %c0_15 = arith.constant 0 : index
    %14 = vector.load %arg10[%c0_14, %c0_15] : memref<8x128xf32, #tpu.memory_space<vmem>>, vector<8x128xf32>
    %c0_i32_16 = arith.constant 0 : i32
    %15 = arith.index_cast %c0_i32_16 : i32 to index
    %c0_17 = arith.constant 0 : index
    %c0_18 = arith.constant 0 : index
    %16 = vector.load %arg11[%15, %c0_17, %c0_18] : memref<8x8x512xf32, #tpu.memory_space<vmem>>, vector<1x8x512xf32>
    %17 = vector.shape_cast %16 : vector<1x8x512xf32> to vector<8x512xf32>
    %cst_19 = arith.constant dense<0.000000e+00> : vector<8x512xf32>
    %18 = tpu.matmul %13, %12, %cst_19 {dimension_numbers = #tpu.dot_dimension_numbers<[1], [0], [0], [1], [0, 0, 1, 1], [], []>} : vector<8x128xf32>, vector<128x512xf32>, vector<8x512xf32> -> vector<8x512xf32>
    %19 = arith.addf %17, %18 : vector<8x512xf32>
    %20 = vector.extract_strided_slice %19 {offsets = [0, 0], sizes = [8, 128], strides = [1, 1]} : vector<8x512xf32> to vector<8x128xf32>
    %21 = arith.negf %20 : vector<8x128xf32>
    %22 = math.exp %21 : vector<8x128xf32>
    %cst_20 = arith.constant 1.000000e+00 : f32
    %23 = vector.broadcast %cst_20 : f32 to vector<8x128xf32>
    %24 = arith.addf %23, %22 : vector<8x128xf32>
    %25 = arith.divf %23, %24 : vector<8x128xf32>
    %26 = vector.extract_strided_slice %19 {offsets = [0, 128], sizes = [8, 128], strides = [1, 1]} : vector<8x512xf32> to vector<8x128xf32>
    %27 = arith.negf %26 : vector<8x128xf32>
    %28 = math.exp %27 : vector<8x128xf32>
    %cst_21 = arith.constant 1.000000e+00 : f32
    %29 = vector.broadcast %cst_21 : f32 to vector<8x128xf32>
    %30 = arith.addf %29, %28 : vector<8x128xf32>
    %31 = arith.divf %29, %30 : vector<8x128xf32>
    %32 = vector.extract_strided_slice %19 {offsets = [0, 256], sizes = [8, 128], strides = [1, 1]} : vector<8x512xf32> to vector<8x128xf32>
    %33 = math.tanh %32 : vector<8x128xf32>
    %34 = vector.extract_strided_slice %19 {offsets = [0, 384], sizes = [8, 128], strides = [1, 1]} : vector<8x512xf32> to vector<8x128xf32>
    %35 = arith.negf %34 : vector<8x128xf32>
    %36 = math.exp %35 : vector<8x128xf32>
    %cst_22 = arith.constant 1.000000e+00 : f32
    %37 = vector.broadcast %cst_22 : f32 to vector<8x128xf32>
    %38 = arith.addf %37, %36 : vector<8x128xf32>
    %39 = arith.divf %37, %38 : vector<8x128xf32>
    %40 = arith.mulf %31, %14 : vector<8x128xf32>
    %41 = arith.mulf %25, %33 : vector<8x128xf32>
    %42 = arith.addf %40, %41 : vector<8x128xf32>
    %43 = math.tanh %42 : vector<8x128xf32>
    %44 = arith.mulf %39, %43 : vector<8x128xf32>
    %45 = arith.index_cast %c0_i32_16 : i32 to index
    %c0_23 = arith.constant 0 : index
    %c0_24 = arith.constant 0 : index
    %46 = vector.load %arg12[%45, %c0_23, %c0_24] : memref<8x8x128xf32, #tpu.memory_space<vmem>>, vector<1x8x128xf32>
    %47 = vector.shape_cast %46 : vector<1x8x128xf32> to vector<8x128xf32>
    %48 = vector.shape_cast %44 : vector<8x128xf32> to vector<1x8x128xf32>
    tpu.vector_store %arg12[%45, %c0_23, %c0_24], %48 {strides = array<i32>} : memref<8x8x128xf32, #tpu.memory_space<vmem>>, vector<1x8x128xf32>,
    %c1_i32 = arith.constant 1 : i32
    %49 = arith.index_cast %c1_i32 : i32 to index
    %c0_25 = arith.constant 0 : index
    %c0_26 = arith.constant 0 : index
    %50 = vector.load %arg11[%49, %c0_25, %c0_26] : memref<8x8x512xf32, #tpu.memory_space<vmem>>, vector<1x8x512xf32>
    %51 = vector.shape_cast %50 : vector<1x8x512xf32> to vector<8x512xf32>
    %cst_27 = arith.constant dense<0.000000e+00> : vector<8x512xf32>
    %52 = tpu.matmul %44, %12, %cst_27 {dimension_numbers = #tpu.dot_dimension_numbers<[1], [0], [0], [1], [0, 0, 1, 1], [], []>} : vector<8x128xf32>, vector<128x512xf32>, vector<8x512xf32> -> vector<8x512xf32>
    %53 = arith.addf %51, %52 : vector<8x512xf32>
    %54 = vector.extract_strided_slice %53 {offsets = [0, 0], sizes = [8, 128], strides = [1, 1]} : vector<8x512xf32> to vector<8x128xf32>
    %55 = arith.negf %54 : vector<8x128xf32>
    %56 = math.exp %55 : vector<8x128xf32>
    %cst_28 = arith.constant 1.000000e+00 : f32
    %57 = vector.broadcast %cst_28 : f32 to vector<8x128xf32>
    %58 = arith.addf %57, %56 : vector<8x128xf32>
    %59 = arith.divf %57, %58 : vector<8x128xf32>
    %60 = vector.extract_strided_slice %53 {offsets = [0, 128], sizes = [8, 128], strides = [1, 1]} : vector<8x512xf32> to vector<8x128xf32>
    %61 = arith.negf %60 : vector<8x128xf32>
    %62 = math.exp %61 : vector<8x128xf32>
    %cst_29 = arith.constant 1.000000e+00 : f32
    %63 = vector.broadcast %cst_29 : f32 to vector<8x128xf32>
    %64 = arith.addf %63, %62 : vector<8x128xf32>
    %65 = arith.divf %63, %64 : vector<8x128xf32>
    %66 = vector.extract_strided_slice %53 {offsets = [0, 256], sizes = [8, 128], strides = [1, 1]} : vector<8x512xf32> to vector<8x128xf32>
    %67 = math.tanh %66 : vector<8x128xf32>
    %68 = vector.extract_strided_slice %53 {offsets = [0, 384], sizes = [8, 128], strides = [1, 1]} : vector<8x512xf32> to vector<8x128xf32>
    %69 = arith.negf %68 : vector<8x128xf32>
    %70 = math.exp %69 : vector<8x128xf32>
    %cst_30 = arith.constant 1.000000e+00 : f32
    %71 = vector.broadcast %cst_30 : f32 to vector<8x128xf32>
    %72 = arith.addf %71, %70 : vector<8x128xf32>
    %73 = arith.divf %71, %72 : vector<8x128xf32>
    %74 = arith.mulf %65, %42 : vector<8x128xf32>
    %75 = arith.mulf %59, %67 : vector<8x128xf32>
    %76 = arith.addf %74, %75 : vector<8x128xf32>
    %77 = math.tanh %76 : vector<8x128xf32>
    %78 = arith.mulf %73, %77 : vector<8x128xf32>
    %79 = arith.index_cast %c1_i32 : i32 to index
    %c0_31 = arith.constant 0 : index
    %c0_32 = arith.constant 0 : index
    %80 = vector.load %arg12[%79, %c0_31, %c0_32] : memref<8x8x128xf32, #tpu.memory_space<vmem>>, vector<1x8x128xf32>
    %81 = vector.shape_cast %80 : vector<1x8x128xf32> to vector<8x128xf32>
    %82 = vector.shape_cast %78 : vector<8x128xf32> to vector<1x8x128xf32>
    tpu.vector_store %arg12[%79, %c0_31, %c0_32], %82 {strides = array<i32>} : memref<8x8x128xf32, #tpu.memory_space<vmem>>, vector<1x8x128xf32>,
    %c2_i32 = arith.constant 2 : i32
    %83 = arith.index_cast %c2_i32 : i32 to index
    %c0_33 = arith.constant 0 : index
    %c0_34 = arith.constant 0 : index
    %84 = vector.load %arg11[%83, %c0_33, %c0_34] : memref<8x8x512xf32, #tpu.memory_space<vmem>>, vector<1x8x512xf32>
    %85 = vector.shape_cast %84 : vector<1x8x512xf32> to vector<8x512xf32>
    %cst_35 = arith.constant dense<0.000000e+00> : vector<8x512xf32>
    %86 = tpu.matmul %78, %12, %cst_35 {dimension_numbers = #tpu.dot_dimension_numbers<[1], [0], [0], [1], [0, 0, 1, 1], [], []>} : vector<8x128xf32>, vector<128x512xf32>, vector<8x512xf32> -> vector<8x512xf32>
    %87 = arith.addf %85, %86 : vector<8x512xf32>
    %88 = vector.extract_strided_slice %87 {offsets = [0, 0], sizes = [8, 128], strides = [1, 1]} : vector<8x512xf32> to vector<8x128xf32>
    %89 = arith.negf %88 : vector<8x128xf32>
    %90 = math.exp %89 : vector<8x128xf32>
    %cst_36 = arith.constant 1.000000e+00 : f32
    %91 = vector.broadcast %cst_36 : f32 to vector<8x128xf32>
    %92 = arith.addf %91, %90 : vector<8x128xf32>
    %93 = arith.divf %91, %92 : vector<8x128xf32>
    %94 = vector.extract_strided_slice %87 {offsets = [0, 128], sizes = [8, 128], strides = [1, 1]} : vector<8x512xf32> to vector<8x128xf32>
    %95 = arith.negf %94 : vector<8x128xf32>
    %96 = math.exp %95 : vector<8x128xf32>
    %cst_37 = arith.constant 1.000000e+00 : f32
    %97 = vector.broadcast %cst_37 : f32 to vector<8x128xf32>
    %98 = arith.addf %97, %96 : vector<8x128xf32>
    %99 = arith.divf %97, %98 : vector<8x128xf32>
    %100 = vector.extract_strided_slice %87 {offsets = [0, 256], sizes = [8, 128], strides = [1, 1]} : vector<8x512xf32> to vector<8x128xf32>
    %101 = math.tanh %100 : vector<8x128xf32>
    %102 = vector.extract_strided_slice %87 {offsets = [0, 384], sizes = [8, 128], strides = [1, 1]} : vector<8x512xf32> to vector<8x128xf32>
    %103 = arith.negf %102 : vector<8x128xf32>
    %104 = math.exp %103 : vector<8x128xf32>
    %cst_38 = arith.constant 1.000000e+00 : f32
    %105 = vector.broadcast %cst_38 : f32 to vector<8x128xf32>
    %106 = arith.addf %105, %104 : vector<8x128xf32>
    %107 = arith.divf %105, %106 : vector<8x128xf32>
    %108 = arith.mulf %99, %76 : vector<8x128xf32>
    %109 = arith.mulf %93, %101 : vector<8x128xf32>
    %110 = arith.addf %108, %109 : vector<8x128xf32>
    %111 = math.tanh %110 : vector<8x128xf32>
    %112 = arith.mulf %107, %111 : vector<8x128xf32>
    %113 = arith.index_cast %c2_i32 : i32 to index
    %c0_39 = arith.constant 0 : index
    %c0_40 = arith.constant 0 : index
    %114 = vector.load %arg12[%113, %c0_39, %c0_40] : memref<8x8x128xf32, #tpu.memory_space<vmem>>, vector<1x8x128xf32>
    %115 = vector.shape_cast %114 : vector<1x8x128xf32> to vector<8x128xf32>
    %116 = vector.shape_cast %112 : vector<8x128xf32> to vector<1x8x128xf32>
    tpu.vector_store %arg12[%113, %c0_39, %c0_40], %116 {strides = array<i32>} : memref<8x8x128xf32, #tpu.memory_space<vmem>>, vector<1x8x128xf32>,
    %c3_i32 = arith.constant 3 : i32
    %117 = arith.index_cast %c3_i32 : i32 to index
    %c0_41 = arith.constant 0 : index
    %c0_42 = arith.constant 0 : index
    %118 = vector.load %arg11[%117, %c0_41, %c0_42] : memref<8x8x512xf32, #tpu.memory_space<vmem>>, vector<1x8x512xf32>
    %119 = vector.shape_cast %118 : vector<1x8x512xf32> to vector<8x512xf32>
    %cst_43 = arith.constant dense<0.000000e+00> : vector<8x512xf32>
    %120 = tpu.matmul %112, %12, %cst_43 {dimension_numbers = #tpu.dot_dimension_numbers<[1], [0], [0], [1], [0, 0, 1, 1], [], []>} : vector<8x128xf32>, vector<128x512xf32>, vector<8x512xf32> -> vector<8x512xf32>
    %121 = arith.addf %119, %120 : vector<8x512xf32>
    %122 = vector.extract_strided_slice %121 {offsets = [0, 0], sizes = [8, 128], strides = [1, 1]} : vector<8x512xf32> to vector<8x128xf32>
    %123 = arith.negf %122 : vector<8x128xf32>
    %124 = math.exp %123 : vector<8x128xf32>
    %cst_44 = arith.constant 1.000000e+00 : f32
    %125 = vector.broadcast %cst_44 : f32 to vector<8x128xf32>
    %126 = arith.addf %125, %124 : vector<8x128xf32>
    %127 = arith.divf %125, %126 : vector<8x128xf32>
    %128 = vector.extract_strided_slice %121 {offsets = [0, 128], sizes = [8, 128], strides = [1, 1]} : vector<8x512xf32> to vector<8x128xf32>
    %129 = arith.negf %128 : vector<8x128xf32>
    %130 = math.exp %129 : vector<8x128xf32>
    %cst_45 = arith.constant 1.000000e+00 : f32
    %131 = vector.broadcast %cst_45 : f32 to vector<8x128xf32>
    %132 = arith.addf %131, %130 : vector<8x128xf32>
    %133 = arith.divf %131, %132 : vector<8x128xf32>
    %134 = vector.extract_strided_slice %121 {offsets = [0, 256], sizes = [8, 128], strides = [1, 1]} : vector<8x512xf32> to vector<8x128xf32>
    %135 = math.tanh %134 : vector<8x128xf32>
    %136 = vector.extract_strided_slice %121 {offsets = [0, 384], sizes = [8, 128], strides = [1, 1]} : vector<8x512xf32> to vector<8x128xf32>
    %137 = arith.negf %136 : vector<8x128xf32>
    %138 = math.exp %137 : vector<8x128xf32>
    %cst_46 = arith.constant 1.000000e+00 : f32
    %139 = vector.broadcast %cst_46 : f32 to vector<8x128xf32>
    %140 = arith.addf %139, %138 : vector<8x128xf32>
    %141 = arith.divf %139, %140 : vector<8x128xf32>
    %142 = arith.mulf %133, %110 : vector<8x128xf32>
    %143 = arith.mulf %127, %135 : vector<8x128xf32>
    %144 = arith.addf %142, %143 : vector<8x128xf32>
    %145 = math.tanh %144 : vector<8x128xf32>
    %146 = arith.mulf %141, %145 : vector<8x128xf32>
    %147 = arith.index_cast %c3_i32 : i32 to index
    %c0_47 = arith.constant 0 : index
    %c0_48 = arith.constant 0 : index
    %148 = vector.load %arg12[%147, %c0_47, %c0_48] : memref<8x8x128xf32, #tpu.memory_space<vmem>>, vector<1x8x128xf32>
    %149 = vector.shape_cast %148 : vector<1x8x128xf32> to vector<8x128xf32>
    %150 = vector.shape_cast %146 : vector<8x128xf32> to vector<1x8x128xf32>
    tpu.vector_store %arg12[%147, %c0_47, %c0_48], %150 {strides = array<i32>} : memref<8x8x128xf32, #tpu.memory_space<vmem>>, vector<1x8x128xf32>,
    %c4_i32 = arith.constant 4 : i32
    %151 = arith.index_cast %c4_i32 : i32 to index
    %c0_49 = arith.constant 0 : index
    %c0_50 = arith.constant 0 : index
    %152 = vector.load %arg11[%151, %c0_49, %c0_50] : memref<8x8x512xf32, #tpu.memory_space<vmem>>, vector<1x8x512xf32>
    %153 = vector.shape_cast %152 : vector<1x8x512xf32> to vector<8x512xf32>
    %cst_51 = arith.constant dense<0.000000e+00> : vector<8x512xf32>
    %154 = tpu.matmul %146, %12, %cst_51 {dimension_numbers = #tpu.dot_dimension_numbers<[1], [0], [0], [1], [0, 0, 1, 1], [], []>} : vector<8x128xf32>, vector<128x512xf32>, vector<8x512xf32> -> vector<8x512xf32>
    %155 = arith.addf %153, %154 : vector<8x512xf32>
    %156 = vector.extract_strided_slice %155 {offsets = [0, 0], sizes = [8, 128], strides = [1, 1]} : vector<8x512xf32> to vector<8x128xf32>
    %157 = arith.negf %156 : vector<8x128xf32>
    %158 = math.exp %157 : vector<8x128xf32>
    %cst_52 = arith.constant 1.000000e+00 : f32
    %159 = vector.broadcast %cst_52 : f32 to vector<8x128xf32>
    %160 = arith.addf %159, %158 : vector<8x128xf32>
    %161 = arith.divf %159, %160 : vector<8x128xf32>
    %162 = vector.extract_strided_slice %155 {offsets = [0, 128], sizes = [8, 128], strides = [1, 1]} : vector<8x512xf32> to vector<8x128xf32>
    %163 = arith.negf %162 : vector<8x128xf32>
    %164 = math.exp %163 : vector<8x128xf32>
    %cst_53 = arith.constant 1.000000e+00 : f32
    %165 = vector.broadcast %cst_53 : f32 to vector<8x128xf32>
    %166 = arith.addf %165, %164 : vector<8x128xf32>
    %167 = arith.divf %165, %166 : vector<8x128xf32>
    %168 = vector.extract_strided_slice %155 {offsets = [0, 256], sizes = [8, 128], strides = [1, 1]} : vector<8x512xf32> to vector<8x128xf32>
    %169 = math.tanh %168 : vector<8x128xf32>
    %170 = vector.extract_strided_slice %155 {offsets = [0, 384], sizes = [8, 128], strides = [1, 1]} : vector<8x512xf32> to vector<8x128xf32>
    %171 = arith.negf %170 : vector<8x128xf32>
    %172 = math.exp %171 : vector<8x128xf32>
    %cst_54 = arith.constant 1.000000e+00 : f32
    %173 = vector.broadcast %cst_54 : f32 to vector<8x128xf32>
    %174 = arith.addf %173, %172 : vector<8x128xf32>
    %175 = arith.divf %173, %174 : vector<8x128xf32>
    %176 = arith.mulf %167, %144 : vector<8x128xf32>
    %177 = arith.mulf %161, %169 : vector<8x128xf32>
    %178 = arith.addf %176, %177 : vector<8x128xf32>
    %179 = math.tanh %178 : vector<8x128xf32>
    %180 = arith.mulf %175, %179 : vector<8x128xf32>
    %181 = arith.index_cast %c4_i32 : i32 to index
    %c0_55 = arith.constant 0 : index
    %c0_56 = arith.constant 0 : index
    %182 = vector.load %arg12[%181, %c0_55, %c0_56] : memref<8x8x128xf32, #tpu.memory_space<vmem>>, vector<1x8x128xf32>
    %183 = vector.shape_cast %182 : vector<1x8x128xf32> to vector<8x128xf32>
    %184 = vector.shape_cast %180 : vector<8x128xf32> to vector<1x8x128xf32>
    tpu.vector_store %arg12[%181, %c0_55, %c0_56], %184 {strides = array<i32>} : memref<8x8x128xf32, #tpu.memory_space<vmem>>, vector<1x8x128xf32>,
    %c5_i32 = arith.constant 5 : i32
    %185 = arith.index_cast %c5_i32 : i32 to index
    %c0_57 = arith.constant 0 : index
    %c0_58 = arith.constant 0 : index
    %186 = vector.load %arg11[%185, %c0_57, %c0_58] : memref<8x8x512xf32, #tpu.memory_space<vmem>>, vector<1x8x512xf32>
    %187 = vector.shape_cast %186 : vector<1x8x512xf32> to vector<8x512xf32>
    %cst_59 = arith.constant dense<0.000000e+00> : vector<8x512xf32>
    %188 = tpu.matmul %180, %12, %cst_59 {dimension_numbers = #tpu.dot_dimension_numbers<[1], [0], [0], [1], [0, 0, 1, 1], [], []>} : vector<8x128xf32>, vector<128x512xf32>, vector<8x512xf32> -> vector<8x512xf32>
    %189 = arith.addf %187, %188 : vector<8x512xf32>
    %190 = vector.extract_strided_slice %189 {offsets = [0, 0], sizes = [8, 128], strides = [1, 1]} : vector<8x512xf32> to vector<8x128xf32>
    %191 = arith.negf %190 : vector<8x128xf32>
    %192 = math.exp %191 : vector<8x128xf32>
    %cst_60 = arith.constant 1.000000e+00 : f32
    %193 = vector.broadcast %cst_60 : f32 to vector<8x128xf32>
    %194 = arith.addf %193, %192 : vector<8x128xf32>
    %195 = arith.divf %193, %194 : vector<8x128xf32>
    %196 = vector.extract_strided_slice %189 {offsets = [0, 128], sizes = [8, 128], strides = [1, 1]} : vector<8x512xf32> to vector<8x128xf32>
    %197 = arith.negf %196 : vector<8x128xf32>
    %198 = math.exp %197 : vector<8x128xf32>
    %cst_61 = arith.constant 1.000000e+00 : f32
    %199 = vector.broadcast %cst_61 : f32 to vector<8x128xf32>
    %200 = arith.addf %199, %198 : vector<8x128xf32>
    %201 = arith.divf %199, %200 : vector<8x128xf32>
    %202 = vector.extract_strided_slice %189 {offsets = [0, 256], sizes = [8, 128], strides = [1, 1]} : vector<8x512xf32> to vector<8x128xf32>
    %203 = math.tanh %202 : vector<8x128xf32>
    %204 = vector.extract_strided_slice %189 {offsets = [0, 384], sizes = [8, 128], strides = [1, 1]} : vector<8x512xf32> to vector<8x128xf32>
    %205 = arith.negf %204 : vector<8x128xf32>
    %206 = math.exp %205 : vector<8x128xf32>
    %cst_62 = arith.constant 1.000000e+00 : f32
    %207 = vector.broadcast %cst_62 : f32 to vector<8x128xf32>
    %208 = arith.addf %207, %206 : vector<8x128xf32>
    %209 = arith.divf %207, %208 : vector<8x128xf32>
    %210 = arith.mulf %201, %178 : vector<8x128xf32>
    %211 = arith.mulf %195, %203 : vector<8x128xf32>
    %212 = arith.addf %210, %211 : vector<8x128xf32>
    %213 = math.tanh %212 : vector<8x128xf32>
    %214 = arith.mulf %209, %213 : vector<8x128xf32>
    %215 = arith.index_cast %c5_i32 : i32 to index
    %c0_63 = arith.constant 0 : index
    %c0_64 = arith.constant 0 : index
    %216 = vector.load %arg12[%215, %c0_63, %c0_64] : memref<8x8x128xf32, #tpu.memory_space<vmem>>, vector<1x8x128xf32>
    %217 = vector.shape_cast %216 : vector<1x8x128xf32> to vector<8x128xf32>
    %218 = vector.shape_cast %214 : vector<8x128xf32> to vector<1x8x128xf32>
    tpu.vector_store %arg12[%215, %c0_63, %c0_64], %218 {strides = array<i32>} : memref<8x8x128xf32, #tpu.memory_space<vmem>>, vector<1x8x128xf32>,
    %c6_i32 = arith.constant 6 : i32
    %219 = arith.index_cast %c6_i32 : i32 to index
    %c0_65 = arith.constant 0 : index
    %c0_66 = arith.constant 0 : index
    %220 = vector.load %arg11[%219, %c0_65, %c0_66] : memref<8x8x512xf32, #tpu.memory_space<vmem>>, vector<1x8x512xf32>
    %221 = vector.shape_cast %220 : vector<1x8x512xf32> to vector<8x512xf32>
    %cst_67 = arith.constant dense<0.000000e+00> : vector<8x512xf32>
    %222 = tpu.matmul %214, %12, %cst_67 {dimension_numbers = #tpu.dot_dimension_numbers<[1], [0], [0], [1], [0, 0, 1, 1], [], []>} : vector<8x128xf32>, vector<128x512xf32>, vector<8x512xf32> -> vector<8x512xf32>
    %223 = arith.addf %221, %222 : vector<8x512xf32>
    %224 = vector.extract_strided_slice %223 {offsets = [0, 0], sizes = [8, 128], strides = [1, 1]} : vector<8x512xf32> to vector<8x128xf32>
    %225 = arith.negf %224 : vector<8x128xf32>
    %226 = math.exp %225 : vector<8x128xf32>
    %cst_68 = arith.constant 1.000000e+00 : f32
    %227 = vector.broadcast %cst_68 : f32 to vector<8x128xf32>
    %228 = arith.addf %227, %226 : vector<8x128xf32>
    %229 = arith.divf %227, %228 : vector<8x128xf32>
    %230 = vector.extract_strided_slice %223 {offsets = [0, 128], sizes = [8, 128], strides = [1, 1]} : vector<8x512xf32> to vector<8x128xf32>
    %231 = arith.negf %230 : vector<8x128xf32>
    %232 = math.exp %231 : vector<8x128xf32>
    %cst_69 = arith.constant 1.000000e+00 : f32
    %233 = vector.broadcast %cst_69 : f32 to vector<8x128xf32>
    %234 = arith.addf %233, %232 : vector<8x128xf32>
    %235 = arith.divf %233, %234 : vector<8x128xf32>
    %236 = vector.extract_strided_slice %223 {offsets = [0, 256], sizes = [8, 128], strides = [1, 1]} : vector<8x512xf32> to vector<8x128xf32>
    %237 = math.tanh %236 : vector<8x128xf32>
    %238 = vector.extract_strided_slice %223 {offsets = [0, 384], sizes = [8, 128], strides = [1, 1]} : vector<8x512xf32> to vector<8x128xf32>
    %239 = arith.negf %238 : vector<8x128xf32>
    %240 = math.exp %239 : vector<8x128xf32>
    %cst_70 = arith.constant 1.000000e+00 : f32
    %241 = vector.broadcast %cst_70 : f32 to vector<8x128xf32>
    %242 = arith.addf %241, %240 : vector<8x128xf32>
    %243 = arith.divf %241, %242 : vector<8x128xf32>
    %244 = arith.mulf %235, %212 : vector<8x128xf32>
    %245 = arith.mulf %229, %237 : vector<8x128xf32>
    %246 = arith.addf %244, %245 : vector<8x128xf32>
    %247 = math.tanh %246 : vector<8x128xf32>
    %248 = arith.mulf %243, %247 : vector<8x128xf32>
    %249 = arith.index_cast %c6_i32 : i32 to index
    %c0_71 = arith.constant 0 : index
    %c0_72 = arith.constant 0 : index
    %250 = vector.load %arg12[%249, %c0_71, %c0_72] : memref<8x8x128xf32, #tpu.memory_space<vmem>>, vector<1x8x128xf32>
    %251 = vector.shape_cast %250 : vector<1x8x128xf32> to vector<8x128xf32>
    %252 = vector.shape_cast %248 : vector<8x128xf32> to vector<1x8x128xf32>
    tpu.vector_store %arg12[%249, %c0_71, %c0_72], %252 {strides = array<i32>} : memref<8x8x128xf32, #tpu.memory_space<vmem>>, vector<1x8x128xf32>,
    %c7_i32 = arith.constant 7 : i32
    %253 = arith.index_cast %c7_i32 : i32 to index
    %c0_73 = arith.constant 0 : index
    %c0_74 = arith.constant 0 : index
    %254 = vector.load %arg11[%253, %c0_73, %c0_74] : memref<8x8x512xf32, #tpu.memory_space<vmem>>, vector<1x8x512xf32>
    %255 = vector.shape_cast %254 : vector<1x8x512xf32> to vector<8x512xf32>
    %cst_75 = arith.constant dense<0.000000e+00> : vector<8x512xf32>
    %256 = tpu.matmul %248, %12, %cst_75 {dimension_numbers = #tpu.dot_dimension_numbers<[1], [0], [0], [1], [0, 0, 1, 1], [], []>} : vector<8x128xf32>, vector<128x512xf32>, vector<8x512xf32> -> vector<8x512xf32>
    %257 = arith.addf %255, %256 : vector<8x512xf32>
    %258 = vector.extract_strided_slice %257 {offsets = [0, 0], sizes = [8, 128], strides = [1, 1]} : vector<8x512xf32> to vector<8x128xf32>
    %259 = arith.negf %258 : vector<8x128xf32>
    %260 = math.exp %259 : vector<8x128xf32>
    %cst_76 = arith.constant 1.000000e+00 : f32
    %261 = vector.broadcast %cst_76 : f32 to vector<8x128xf32>
    %262 = arith.addf %261, %260 : vector<8x128xf32>
    %263 = arith.divf %261, %262 : vector<8x128xf32>
    %264 = vector.extract_strided_slice %257 {offsets = [0, 128], sizes = [8, 128], strides = [1, 1]} : vector<8x512xf32> to vector<8x128xf32>
    %265 = arith.negf %264 : vector<8x128xf32>
    %266 = math.exp %265 : vector<8x128xf32>
    %cst_77 = arith.constant 1.000000e+00 : f32
    %267 = vector.broadcast %cst_77 : f32 to vector<8x128xf32>
    %268 = arith.addf %267, %266 : vector<8x128xf32>
    %269 = arith.divf %267, %268 : vector<8x128xf32>
    %270 = vector.extract_strided_slice %257 {offsets = [0, 256], sizes = [8, 128], strides = [1, 1]} : vector<8x512xf32> to vector<8x128xf32>
    %271 = math.tanh %270 : vector<8x128xf32>
    %272 = vector.extract_strided_slice %257 {offsets = [0, 384], sizes = [8, 128], strides = [1, 1]} : vector<8x512xf32> to vector<8x128xf32>
    %273 = arith.negf %272 : vector<8x128xf32>
    %274 = math.exp %273 : vector<8x128xf32>
    %cst_78 = arith.constant 1.000000e+00 : f32
    %275 = vector.broadcast %cst_78 : f32 to vector<8x128xf32>
    %276 = arith.addf %275, %274 : vector<8x128xf32>
    %277 = arith.divf %275, %276 : vector<8x128xf32>
    %278 = arith.mulf %269, %246 : vector<8x128xf32>
    %279 = arith.mulf %263, %271 : vector<8x128xf32>
    %280 = arith.addf %278, %279 : vector<8x128xf32>
    %281 = math.tanh %280 : vector<8x128xf32>
    %282 = arith.mulf %277, %281 : vector<8x128xf32>
    %283 = arith.index_cast %c7_i32 : i32 to index
    %c0_79 = arith.constant 0 : index
    %c0_80 = arith.constant 0 : index
    %284 = vector.load %arg12[%283, %c0_79, %c0_80] : memref<8x8x128xf32, #tpu.memory_space<vmem>>, vector<1x8x128xf32>
    %285 = vector.shape_cast %284 : vector<1x8x128xf32> to vector<8x128xf32>
    %286 = vector.shape_cast %282 : vector<8x128xf32> to vector<1x8x128xf32>
    tpu.vector_store %arg12[%283, %c0_79, %c0_80], %286 {strides = array<i32>} : memref<8x8x128xf32, #tpu.memory_space<vmem>>, vector<1x8x128xf32>,
    %c8_i32 = arith.constant 8 : i32
    %c0_81 = arith.constant 0 : index
    %c0_82 = arith.constant 0 : index
    %287 = vector.load %arg9[%c0_81, %c0_82] : memref<8x128xf32, #tpu.memory_space<vmem>>, vector<8x128xf32>
    tpu.vector_store %arg9[%c0_81, %c0_82], %282 {strides = array<i32>} : memref<8x128xf32, #tpu.memory_space<vmem>>, vector<8x128xf32>,
    %c0_83 = arith.constant 0 : index
    %c0_84 = arith.constant 0 : index
    %288 = vector.load %arg10[%c0_83, %c0_84] : memref<8x128xf32, #tpu.memory_space<vmem>>, vector<8x128xf32>
    tpu.vector_store %arg10[%c0_83, %c0_84], %280 {strides = array<i32>} : memref<8x128xf32, #tpu.memory_space<vmem>>, vector<8x128xf32>,
    %c0_85 = arith.constant 0 : index
    %c0_86 = arith.constant 0 : index
    %c0_87 = arith.constant 0 : index
    %289 = vector.load %arg12[%c0_85, %c0_86, %c0_87] : memref<8x8x128xf32, #tpu.memory_space<vmem>>, vector<8x8x128xf32>
    %290 = vector.shape_cast %289 : vector<8x8x128xf32> to vector<64x128xf32>
    %c0_88 = arith.constant 0 : index
    %c0_89 = arith.constant 0 : index
    %291 = vector.load %arg6[%c0_88, %c0_89] : memref<128x128xf32, #tpu.memory_space<vmem>>, vector<128x128xf32>
    %cst_90 = arith.constant dense<0.000000e+00> : vector<64x128xf32>
    %292 = tpu.matmul %290, %291, %cst_90 {dimension_numbers = #tpu.dot_dimension_numbers<[1], [0], [0], [1], [0, 0, 1, 1], [], []>} : vector<64x128xf32>, vector<128x128xf32>, vector<64x128xf32> -> vector<64x128xf32>
    %c0_91 = arith.constant 0 : index
    %c0_92 = arith.constant 0 : index
    %293 = vector.load %arg7[%c0_91, %c0_92] : memref<1x128xf32, #tpu.memory_space<vmem>>, vector<1x128xf32>
    %294 = vector.broadcast %293 : vector<1x128xf32> to vector<64x128xf32>
    %295 = arith.addf %292, %294 : vector<64x128xf32>
    %296 = vector.shape_cast %295 : vector<64x128xf32> to vector<8x8x128xf32>
    %c0_93 = arith.constant 0 : index
    %c0_94 = arith.constant 0 : index
    %c0_95 = arith.constant 0 : index
    %297 = vector.load %arg8[%c0_93, %c0_94, %c0_95] : memref<8x8x128xf32, #tpu.memory_space<vmem>>, vector<8x8x128xf32>
    tpu.vector_store %arg8[%c0_93, %c0_94, %c0_95], %296 {strides = array<i32>} : memref<8x8x128xf32, #tpu.memory_space<vmem>>, vector<8x8x128xf32>,
    return
  }
  func.func @transform_0(%arg0: i32, %arg1: i32) -> (i32, i32, i32) {
    %c0_i32 = arith.constant 0 : i32
    %c0_i32_0 = arith.constant 0 : i32
    return %arg1, %arg0, %c0_i32 : i32, i32, i32
  }
  func.func @transform_1(%arg0: i32, %arg1: i32) -> (i32, i32) {
    %c0_i32 = arith.constant 0 : i32
    %c0_i32_0 = arith.constant 0 : i32
    %c0_i32_1 = arith.constant 0 : i32
    return %c0_i32, %c0_i32_0 : i32, i32
  }
  func.func @transform_2(%arg0: i32, %arg1: i32) -> (i32, i32) {
    %c0_i32 = arith.constant 0 : i32
    %c0_i32_0 = arith.constant 0 : i32
    %c0_i32_1 = arith.constant 0 : i32
    return %c0_i32, %c0_i32_0 : i32, i32
  }
  func.func @transform_3(%arg0: i32, %arg1: i32) -> (i32, i32) {
    %c0_i32 = arith.constant 0 : i32
    %c0_i32_0 = arith.constant 0 : i32
    %c0_i32_1 = arith.constant 0 : i32
    return %c0_i32, %c0_i32_0 : i32, i32
  }
  func.func @transform_4(%arg0: i32, %arg1: i32) -> (i32, i32) {
    %c0_i32 = arith.constant 0 : i32
    %c0_i32_0 = arith.constant 0 : i32
    %c0_i32_1 = arith.constant 0 : i32
    return %c0_i32, %c0_i32_0 : i32, i32
  }
  func.func @transform_5(%arg0: i32, %arg1: i32) -> (i32, i32) {
    %c0_i32 = arith.constant 0 : i32
    %c0_i32_0 = arith.constant 0 : i32
    %c0_i32_1 = arith.constant 0 : i32
    return %c0_i32, %c0_i32_0 : i32, i32
  }
  func.func @transform_6(%arg0: i32, %arg1: i32) -> (i32, i32, i32) {
    %c0_i32 = arith.constant 0 : i32
    %c0_i32_0 = arith.constant 0 : i32
    return %arg1, %arg0, %c0_i32 : i32, i32, i32
  }
}

</mosaic_0001>

<llo_original>
// kernel: sequence_model_forward.1
$region0: #{sequence_model_forward.1}
  #allocation0 [shape = 'u32[]', space=smem, size = 0x4, offset = 0x4, fixed_abs, tag = 'smem constant byte address 0x4 - core index']
  #allocation1 [shape = 'u32[144,128]{1,0:T(1,128)}', space=vmem, size = 0x12000, scoped, tag = 'internal scratch']
  #allocation2 [shape = 'f32[8,128]{1,0:T(8,128)}', space=vmem, size = 0x1000, scoped, tag = 'scratch operand']
  #allocation3 [shape = 'f32[8,128]{1,0:T(8,128)}', space=vmem, size = 0x1000, scoped, tag = 'scratch operand']
  #allocation4 [shape = 'f32[8,8,512]{2,1,0:T(8,128)}', space=vmem, size = 0x20000, scoped, tag = 'scratch operand']
  #allocation5 [shape = 'f32[8,8,128]{2,1,0:T(8,128)}', space=vmem, size = 0x8000, scoped, tag = 'scratch operand']
  %s0 = inlined_call_operand.vmem [shape: f32[8,8,8], index: 0, kind: input, shape index: {}]
  %s1 = inlined_call_operand.vmem [shape: f32[8,512], index: 1, kind: input, shape index: {}]
  %s2 = inlined_call_operand.vmem [shape: f32[1,512], index: 2, kind: input, shape index: {}]
  %s3 = inlined_call_operand.vmem [shape: f32[128,512], index: 3, kind: input, shape index: {}]
  %s4 = inlined_call_operand.vmem [shape: f32[128,128], index: 4, kind: input, shape index: {}]
  %s5 = inlined_call_operand.vmem [shape: f32[1,128], index: 5, kind: input, shape index: {}]
  %s6 = inlined_call_operand.vmem [shape: f32[8,8,128], index: 6, kind: output, shape index: {}]
  %s7 = sld [smem:[#allocation0]]
  $region38: #{sequence_model_forward.1} parent=0
    _
  %s9 = ssub.s32 1, %s7
  %s10 = scalar_select 0, %s9, %s7
  // Predicated region
  $region2: #{sequence_model_forward.1} parent=0 // pred_check
    _
  $region3: #{sequence_model_forward.1} parent=0 // pred_check_branch
    %12 = sbr.rel (0) target = $region5
  $region4: #{sequence_model_forward.1} parent=0 // pred_region
    _
  $region5: #{sequence_model_forward.1} parent=0 // pred_fallthru
    _
  // Predicated region
  $region6: #{sequence_model_forward.1} parent=0 // pred_check
    _
  $region7: #{sequence_model_forward.1} parent=0 // pred_check_branch
    %14 = sbr.rel (0) target = $region9
  $region8: #{sequence_model_forward.1} parent=0 // pred_region
    _
  $region9: #{sequence_model_forward.1} parent=0 // pred_fallthru
    _
  // Predicated region
  $region10: #{sequence_model_forward.1} parent=0 // pred_check
    _
  $region11: #{sequence_model_forward.1} parent=0 // pred_check_branch
    %16 = sbr.rel (0) target = $region13
  $region12: #{sequence_model_forward.1} parent=0 // pred_region
    _
  $region13: #{sequence_model_forward.1} parent=0 // pred_fallthru
    _
  // Predicated region
  $region14: #{sequence_model_forward.1} parent=0 // pred_check
    _
  $region15: #{sequence_model_forward.1} parent=0 // pred_check_branch
    %18 = sbr.rel (0) target = $region17
  $region16: #{sequence_model_forward.1} parent=0 // pred_region
    _
  $region17: #{sequence_model_forward.1} parent=0 // pred_fallthru
    _
  // Predicated region
  $region18: #{sequence_model_forward.1} parent=0 // pred_check
    _
  $region19: #{sequence_model_forward.1} parent=0 // pred_check_branch
    %20 = sbr.rel (0) target = $region21
  $region20: #{sequence_model_forward.1} parent=0 // pred_region
    _
  $region21: #{sequence_model_forward.1} parent=0 // pred_fallthru
    _
  // Predicated region
  $region22: #{sequence_model_forward.1} parent=0 // pred_check
    _
  $region23: #{sequence_model_forward.1} parent=0 // pred_check_branch
    %22 = sbr.rel (0) target = $region25
  $region24: #{sequence_model_forward.1} parent=0 // pred_region
    _
  $region25: #{sequence_model_forward.1} parent=0 // pred_fallthru
    _
  %p23 = scmp.eq.s32.totalorder 0, 0
  // Predicated region
  $region26: #{sequence_model_forward.1} parent=0 // pred_check
    %p24 = pneg %p23
  $region27: #{sequence_model_forward.1} parent=0 // pred_check_branch
    %26 = sbr.rel (%p24) target = $region29
  $region28: #{sequence_model_forward.1} parent=0 // pred_region
    %27 = vst [vmem:[#allocation2] sm:$0xff] 0.0
    %28 = vst [vmem:[#allocation3] sm:$0xff] 0.0
  $region29: #{sequence_model_forward.1} parent=0 // pred_fallthru
    _
  %v29 = vld [vmem:[%s0] sm:$0xff]
  %v30 = vld [vmem:[%s0 + $0x8] sm:$0xff]
  %v31 = vld [vmem:[%s0 + $0x10] sm:$0xff]
  %v32 = vld [vmem:[%s0 + $0x18] sm:$0xff]
  %v33 = vld [vmem:[%s0 + $0x20] sm:$0xff]
  %v34 = vld [vmem:[%s0 + $0x28] sm:$0xff]
  %v35 = vld [vmem:[%s0 + $0x30] sm:$0xff]
  %v36 = vld [vmem:[%s0 + $0x38] sm:$0xff]
  %v37 = vld [vmem:[%s1] sm:$0xff]
  %v38 = vld [vmem:[%s1 + $0x8] sm:$0xff]
  %v39 = vld [vmem:[%s1 + $0x10] sm:$0xff]
  %v40 = vld [vmem:[%s1 + $0x18] sm:$0xff]
  %v41 = vld [vmem:[%s2] sm:$0xf]
  %v43 = vlaneseq
  %v44 = vshrl.u32 %v43, 7
  %v45 = vsub.s32 0, %v44
  %v46 = vrot.slane %v41, %v45
  %v47 = vlaneseq
  %v48 = vshrl.u32 %v47, 7
  %v49 = vsub.s32 1, %v48
  %v50 = vrot.slane %v41, %v49
  %v51 = vlaneseq
  %v52 = vshrl.u32 %v51, 7
  %v53 = vsub.s32 2, %v52
  %v54 = vrot.slane %v41, %v53
  %v55 = vlaneseq
  %v56 = vshrl.u32 %v55, 7
  %v57 = vsub.s32 3, %v56
  %v58 = vrot.slane %v41, %v57
  %vm63 = vcmask 64512
  %v65 = vsel %vm63, %v29, 0
  %v68 = vsel %vm63, %v30, 0
  %v71 = vsel %vm63, %v31, 0
  %v74 = vsel %vm63, %v32, 0
  %v77 = vsel %vm63, %v33, 0
  %v80 = vsel %vm63, %v34, 0
  %v83 = vsel %vm63, %v35, 0
  %v86 = vsel %vm63, %v36, 0
  %88 = vmatprep.subr.mxu0 %v38
  %89 = vmatpush1.msra.mxu0 %v37
  %90 = vmatprep.subr.mxu0 0.0
  %91 = vmatpush1.msra.mxu0 0.0
  %92 = vmatprep.subr.mxu0 0.0
  %93 = vmatpush1.msra.mxu0 0.0
  %94 = vmatprep.subr.mxu0 0.0
  %95 = vmatpush1.msra.mxu0 0.0
  %96 = vmatprep.subr.mxu0 0.0
  %97 = vmatpush1.msra.mxu0 0.0
  %98 = vmatprep.subr.mxu0 0.0
  %99 = vmatpush1.msra.mxu0 0.0
  %100 = vmatprep.subr.mxu0 0.0
  %101 = vmatpush1.msra.mxu0 0.0
  %102 = vmatprep.subr.mxu0 0.0
  %103 = vmatpush1.msra.mxu0 0.0
  %104 = vmatprep.subr.mxu0 0.0
  %105 = vmatpush1.msra.mxu0 0.0
  %106 = vmatprep.subr.mxu0 0.0
  %107 = vmatpush1.msra.mxu0 0.0
  %108 = vmatprep.subr.mxu0 0.0
  %109 = vmatpush1.msra.mxu0 0.0
  %110 = vmatprep.subr.mxu0 0.0
  %111 = vmatpush1.msra.mxu0 0.0
  %112 = vmatprep.subr.mxu0 0.0
  %113 = vmatpush1.msra.mxu0 0.0
  %114 = vmatprep.subr.mxu0 0.0
  %115 = vmatpush1.msra.mxu0 0.0
  %116 = vmatprep.subr.mxu0 0.0
  %117 = vmatpush1.msra.mxu0 0.0
  %118 = vmatprep.subr.mxu0 0.0
  %119 = vmatpush1.msra.mxu0 0.0
  %120 = vmatprep.subr.mxu0 0.0
  %121 = vmatpush1.msra.mxu0 0.0
  %122 = vmatprep.subr.mxu0 0.0
  %123 = vmatpush1.msra.mxu0 0.0
  %124 = vmatprep.subr.mxu0 0.0
  %125 = vmatpush1.msra.mxu0 0.0
  %126 = vmatprep.subr.mxu0 0.0
  %127 = vmatpush1.msra.mxu0 0.0
  %128 = vmatprep.subr.mxu0 0.0
  %129 = vmatpush1.msra.mxu0 0.0
  %130 = vmatprep.subr.mxu0 0.0
  %131 = vmatpush1.msra.mxu0 0.0
  %132 = vmatprep.subr.mxu0 0.0
  %133 = vmatpush1.msra.mxu0 0.0
  %134 = vmatprep.subr.mxu0 0.0
  %135 = vmatpush1.msra.mxu0 0.0
  %136 = vmatprep.subr.mxu0 0.0
  %137 = vmatpush1.msra.mxu0 0.0
  %138 = vmatprep.subr.mxu0 0.0
  %139 = vmatpush1.msra.mxu0 0.0
  %140 = vmatprep.subr.mxu0 0.0
  %141 = vmatpush1.msra.mxu0 0.0
  %142 = vmatprep.subr.mxu0 0.0
  %143 = vmatpush1.msra.mxu0 0.0
  %144 = vmatprep.subr.mxu0 0.0
  %145 = vmatpush1.msra.mxu0 0.0
  %146 = vmatprep.subr.mxu0 0.0
  %147 = vmatpush1.msra.mxu0 0.0
  %148 = vmatprep.subr.mxu0 0.0
  %149 = vmatpush1.msra.mxu0 0.0
  %150 = vmatprep.subr.mxu0 0.0
  %151 = vmatpush1.msra.mxu0 0.0
  %152 = vmatprep.mubr.f32.mxu0 0.0
  %153 = vmatmul.mubr.f32.gmra.mrb[0].mxu0 %v65
  %v154 = vpop.f32.mrb[0].mxu0
  %v155 = vadd.f32 %v46, %v154
  %v156 = vpop.f32.mrb[0].mxu0
  %v157 = vadd.f32 %v50, %v156
  %158 = vmatprep.mubr.f32.mxu0 0.0
  %159 = vmatmul.mubr.f32.gmra.mrb[0].mxu0 %v68
  %v160 = vpop.f32.mrb[0].mxu0
  %v161 = vadd.f32 %v46, %v160
  %v162 = vpop.f32.mrb[0].mxu0
  %v163 = vadd.f32 %v50, %v162
  %164 = vmatprep.mubr.f32.mxu0 0.0
  %165 = vmatmul.mubr.f32.gmra.mrb[0].mxu0 %v71
  %v166 = vpop.f32.mrb[0].mxu0
  %v167 = vadd.f32 %v46, %v166
  %v168 = vpop.f32.mrb[0].mxu0
  %v169 = vadd.f32 %v50, %v168
  %170 = vmatprep.mubr.f32.mxu0 0.0
  %171 = vmatmul.mubr.f32.gmra.mrb[0].mxu0 %v74
  %v172 = vpop.f32.mrb[0].mxu0
  %v173 = vadd.f32 %v46, %v172
  %v174 = vpop.f32.mrb[0].mxu0
  %v175 = vadd.f32 %v50, %v174
  %176 = vmatprep.mubr.f32.mxu0 0.0
  %177 = vmatmul.mubr.f32.gmra.mrb[0].mxu0 %v77
  %v178 = vpop.f32.mrb[0].mxu0
  %v179 = vadd.f32 %v46, %v178
  %v180 = vpop.f32.mrb[0].mxu0
  %v181 = vadd.f32 %v50, %v180
  %182 = vmatprep.mubr.f32.mxu0 0.0
  %183 = vmatmul.mubr.f32.gmra.mrb[0].mxu0 %v80
  %v184 = vpop.f32.mrb[0].mxu0
  %v185 = vadd.f32 %v46, %v184
  %v186 = vpop.f32.mrb[0].mxu0
  %v187 = vadd.f32 %v50, %v186
  %188 = vmatprep.mubr.f32.mxu0 0.0
  %189 = vmatmul.mubr.f32.gmra.mrb[0].mxu0 %v83
  %v190 = vpop.f32.mrb[0].mxu0
  %v191 = vadd.f32 %v46, %v190
  %v192 = vpop.f32.mrb[0].mxu0
  %v193 = vadd.f32 %v50, %v192
  %194 = vmatprep.mubr.f32.mxu0 0.0
  %195 = vmatmul.mubr.f32.gmra.mrb[0].mxu0 %v86
  %v196 = vpop.f32.mrb[0].mxu0
  %v197 = vadd.f32 %v46, %v196
  %v198 = vpop.f32.mrb[0].mxu0
  %v199 = vadd.f32 %v50, %v198
  %200 = vdwg.mxu0
  %201 = vmatprep.subr.mxu0 %v40
  %202 = vmatpush1.msra.mxu0 %v39
  %203 = vmatprep.subr.mxu0 0.0
  %204 = vmatpush1.msra.mxu0 0.0
  %205 = vmatprep.subr.mxu0 0.0
  %206 = vmatpush1.msra.mxu0 0.0
  %207 = vmatprep.subr.mxu0 0.0
  %208 = vmatpush1.msra.mxu0 0.0
  %209 = vmatprep.subr.mxu0 0.0
  %210 = vmatpush1.msra.mxu0 0.0
  %211 = vmatprep.subr.mxu0 0.0
  %212 = vmatpush1.msra.mxu0 0.0
  %213 = vmatprep.subr.mxu0 0.0
  %214 = vmatpush1.msra.mxu0 0.0
  %215 = vmatprep.subr.mxu0 0.0
  %216 = vmatpush1.msra.mxu0 0.0
  %217 = vmatprep.subr.mxu0 0.0
  %218 = vmatpush1.msra.mxu0 0.0
  %219 = vmatprep.subr.mxu0 0.0
  %220 = vmatpush1.msra.mxu0 0.0
  %221 = vmatprep.subr.mxu0 0.0
  %222 = vmatpush1.msra.mxu0 0.0
  %223 = vmatprep.subr.mxu0 0.0
  %224 = vmatpush1.msra.mxu0 0.0
  %225 = vmatprep.subr.mxu0 0.0
  %226 = vmatpush1.msra.mxu0 0.0
  %227 = vmatprep.subr.mxu0 0.0
  %228 = vmatpush1.msra.mxu0 0.0
  %229 = vmatprep.subr.mxu0 0.0
  %230 = vmatpush1.msra.mxu0 0.0
  %231 = vmatprep.subr.mxu0 0.0
  %232 = vmatpush1.msra.mxu0 0.0
  %233 = vmatprep.subr.mxu0 0.0
  %234 = vmatpush1.msra.mxu0 0.0
  %235 = vmatprep.subr.mxu0 0.0
  %236 = vmatpush1.msra.mxu0 0.0
  %237 = vmatprep.subr.mxu0 0.0
  %238 = vmatpush1.msra.mxu0 0.0
  %239 = vmatprep.subr.mxu0 0.0
  %240 = vmatpush1.msra.mxu0 0.0
  %241 = vmatprep.subr.mxu0 0.0
  %242 = vmatpush1.msra.mxu0 0.0
  %243 = vmatprep.subr.mxu0 0.0
  %244 = vmatpush1.msra.mxu0 0.0
  %245 = vmatprep.subr.mxu0 0.0
  %246 = vmatpush1.msra.mxu0 0.0
  %247 = vmatprep.subr.mxu0 0.0
  %248 = vmatpush1.msra.mxu0 0.0
  %249 = vmatprep.subr.mxu0 0.0
  %250 = vmatpush1.msra.mxu0 0.0
  %251 = vmatprep.subr.mxu0 0.0
  %252 = vmatpush1.msra.mxu0 0.0
  %253 = vmatprep.subr.mxu0 0.0
  %254 = vmatpush1.msra.mxu0 0.0
  %255 = vmatprep.subr.mxu0 0.0
  %256 = vmatpush1.msra.mxu0 0.0
  %257 = vmatprep.subr.mxu0 0.0
  %258 = vmatpush1.msra.mxu0 0.0
  %259 = vmatprep.subr.mxu0 0.0
  %260 = vmatpush1.msra.mxu0 0.0
  %261 = vmatprep.subr.mxu0 0.0
  %262 = vmatpush1.msra.mxu0 0.0
  %263 = vmatprep.subr.mxu0 0.0
  %264 = vmatpush1.msra.mxu0 0.0
  %265 = vmatprep.mubr.f32.mxu0 0.0
  %266 = vmatmul.mubr.f32.gmra.mrb[0].mxu0 %v65
  %v267 = vpop.f32.mrb[0].mxu0
  %v268 = vadd.f32 %v54, %v267
  %v269 = vpop.f32.mrb[0].mxu0
  %v270 = vadd.f32 %v58, %v269
  %271 = vmatprep.mubr.f32.mxu0 0.0
  %272 = vmatmul.mubr.f32.gmra.mrb[0].mxu0 %v68
  %v273 = vpop.f32.mrb[0].mxu0
  %v274 = vadd.f32 %v54, %v273
  %v275 = vpop.f32.mrb[0].mxu0
  %v276 = vadd.f32 %v58, %v275
  %277 = vmatprep.mubr.f32.mxu0 0.0
  %278 = vmatmul.mubr.f32.gmra.mrb[0].mxu0 %v71
  %v279 = vpop.f32.mrb[0].mxu0
  %v280 = vadd.f32 %v54, %v279
  %v281 = vpop.f32.mrb[0].mxu0
  %v282 = vadd.f32 %v58, %v281
  %283 = vmatprep.mubr.f32.mxu0 0.0
  %284 = vmatmul.mubr.f32.gmra.mrb[0].mxu0 %v74
  %v285 = vpop.f32.mrb[0].mxu0
  %v286 = vadd.f32 %v54, %v285
  %v287 = vpop.f32.mrb[0].mxu0
  %v288 = vadd.f32 %v58, %v287
  %289 = vmatprep.mubr.f32.mxu0 0.0
  %290 = vmatmul.mubr.f32.gmra.mrb[0].mxu0 %v77
  %v291 = vpop.f32.mrb[0].mxu0
  %v292 = vadd.f32 %v54, %v291
  %v293 = vpop.f32.mrb[0].mxu0
  %v294 = vadd.f32 %v58, %v293
  %295 = vmatprep.mubr.f32.mxu0 0.0
  %296 = vmatmul.mubr.f32.gmra.mrb[0].mxu0 %v80
  %v297 = vpop.f32.mrb[0].mxu0
  %v298 = vadd.f32 %v54, %v297
  %v299 = vpop.f32.mrb[0].mxu0
  %v300 = vadd.f32 %v58, %v299
  %301 = vmatprep.mubr.f32.mxu0 0.0
  %302 = vmatmul.mubr.f32.gmra.mrb[0].mxu0 %v83
  %v303 = vpop.f32.mrb[0].mxu0
  %v304 = vadd.f32 %v54, %v303
  %v305 = vpop.f32.mrb[0].mxu0
  %v306 = vadd.f32 %v58, %v305
  %307 = vmatprep.mubr.f32.mxu0 0.0
  %308 = vmatmul.mubr.f32.gmra.mrb[0].mxu0 %v86
  %v309 = vpop.f32.mrb[0].mxu0
  %v310 = vadd.f32 %v54, %v309
  %v311 = vpop.f32.mrb[0].mxu0
  %v312 = vadd.f32 %v58, %v311
  %313 = vdwg.mxu0
  %314 = vst [vmem:[#allocation4] sm:$0xff] %v155
  %315 = vst [vmem:[#allocation4 + $0x8] sm:$0xff] %v157
  %316 = vst [vmem:[#allocation4 + $0x10] sm:$0xff] %v268
  %317 = vst [vmem:[#allocation4 + $0x18] sm:$0xff] %v270
  %318 = vst [vmem:[#allocation4 + $0x20] sm:$0xff] %v161
  %319 = vst [vmem:[#allocation4 + $0x28] sm:$0xff] %v163
  %320 = vst [vmem:[#allocation4 + $0x30] sm:$0xff] %v274
  %321 = vst [vmem:[#allocation4 + $0x38] sm:$0xff] %v276
  %322 = vst [vmem:[#allocation4 + $0x40] sm:$0xff] %v167
  %323 = vst [vmem:[#allocation4 + $0x48] sm:$0xff] %v169
  %324 = vst [vmem:[#allocation4 + $0x50] sm:$0xff] %v280
  %325 = vst [vmem:[#allocation4 + $0x58] sm:$0xff] %v282
  %326 = vst [vmem:[#allocation4 + $0x60] sm:$0xff] %v173
  %327 = vst [vmem:[#allocation4 + $0x68] sm:$0xff] %v175
  %328 = vst [vmem:[#allocation4 + $0x70] sm:$0xff] %v286
  %329 = vst [vmem:[#allocation4 + $0x78] sm:$0xff] %v288
  %330 = vst [vmem:[#allocation4 + $0x80] sm:$0xff] %v179
  %331 = vst [vmem:[#allocation4 + $0x88] sm:$0xff] %v181
  %332 = vst [vmem:[#allocation4 + $0x90] sm:$0xff] %v292
  %333 = vst [vmem:[#allocation4 + $0x98] sm:$0xff] %v294
  %334 = vst [vmem:[#allocation4 + $0xa0] sm:$0xff] %v185
  %335 = vst [vmem:[#allocation4 + $0xa8] sm:$0xff] %v187
  %336 = vst [vmem:[#allocation4 + $0xb0] sm:$0xff] %v298
  %337 = vst [vmem:[#allocation4 + $0xb8] sm:$0xff] %v300
  %338 = vst [vmem:[#allocation4 + $0xc0] sm:$0xff] %v191
  %339 = vst [vmem:[#allocation4 + $0xc8] sm:$0xff] %v193
  %340 = vst [vmem:[#allocation4 + $0xd0] sm:$0xff] %v304
  %341 = vst [vmem:[#allocation4 + $0xd8] sm:$0xff] %v306
  %342 = vst [vmem:[#allocation4 + $0xe0] sm:$0xff] %v197
  %343 = vst [vmem:[#allocation4 + $0xe8] sm:$0xff] %v199
  %344 = vst [vmem:[#allocation4 + $0xf0] sm:$0xff] %v310
  %345 = vst [vmem:[#allocation4 + $0xf8] sm:$0xff] %v312
  %v346 = vld [vmem:[%s3] sm:$0xff]
  %v347 = vld [vmem:[%s3 + $0x8] sm:$0xff]
  %v348 = vld [vmem:[%s3 + $0x10] sm:$0xff]
  %v349 = vld [vmem:[%s3 + $0x18] sm:$0xff]
  %v350 = vld [vmem:[%s3 + $0x20] sm:$0xff]
  %v351 = vld [vmem:[%s3 + $0x28] sm:$0xff]
  %v352 = vld [vmem:[%s3 + $0x30] sm:$0xff]
  %v353 = vld [vmem:[%s3 + $0x38] sm:$0xff]
  %v354 = vld [vmem:[%s3 + $0x40] sm:$0xff]
  %v355 = vld [vmem:[%s3 + $0x48] sm:$0xff]
  %v356 = vld [vmem:[%s3 + $0x50] sm:$0xff]
  %v357 = vld [vmem:[%s3 + $0x58] sm:$0xff]
  %v358 = vld [vmem:[%s3 + $0x60] sm:$0xff]
  %v359 = vld [vmem:[%s3 + $0x68] sm:$0xff]
  %v360 = vld [vmem:[%s3 + $0x70] sm:$0xff]
  %v361 = vld [vmem:[%s3 + $0x78] sm:$0xff]
  %v362 = vld [vmem:[%s3 + $0x80] sm:$0xff]
  %v363 = vld [vmem:[%s3 + $0x88] sm:$0xff]
  %v364 = vld [vmem:[%s3 + $0x90] sm:$0xff]
  %v365 = vld [vmem:[%s3 + $0x98] sm:$0xff]
  %v366 = vld [vmem:[%s3 + $0xa0] sm:$0xff]
  %v367 = vld [vmem:[%s3 + $0xa8] sm:$0xff]
  %v368 = vld [vmem:[%s3 + $0xb0] sm:$0xff]
  %v369 = vld [vmem:[%s3 + $0xb8] sm:$0xff]
  %v370 = vld [vmem:[%s3 + $0xc0] sm:$0xff]
  %v371 = vld [vmem:[%s3 + $0xc8] sm:$0xff]
  %v372 = vld [vmem:[%s3 + $0xd0] sm:$0xff]
  %v373 = vld [vmem:[%s3 + $0xd8] sm:$0xff]
  %v374 = vld [vmem:[%s3 + $0xe0] sm:$0xff]
  %v375 = vld [vmem:[%s3 + $0xe8] sm:$0xff]
  %v376 = vld [vmem:[%s3 + $0xf0] sm:$0xff]
  %v377 = vld [vmem:[%s3 + $0xf8] sm:$0xff]
  %v378 = vld [vmem:[%s3 + $0x100] sm:$0xff]
  %v379 = vld [vmem:[%s3 + $0x108] sm:$0xff]
  %v380 = vld [vmem:[%s3 + $0x110] sm:$0xff]
  %v381 = vld [vmem:[%s3 + $0x118] sm:$0xff]
  %v382 = vld [vmem:[%s3 + $0x120] sm:$0xff]
  %v383 = vld [vmem:[%s3 + $0x128] sm:$0xff]
  %v384 = vld [vmem:[%s3 + $0x130] sm:$0xff]
  %v385 = vld [vmem:[%s3 + $0x138] sm:$0xff]
  %v386 = vld [vmem:[%s3 + $0x140] sm:$0xff]
  %v387 = vld [vmem:[%s3 + $0x148] sm:$0xff]
  %v388 = vld [vmem:[%s3 + $0x150] sm:$0xff]
  %v389 = vld [vmem:[%s3 + $0x158] sm:$0xff]
  %v390 = vld [vmem:[%s3 + $0x160] sm:$0xff]
  %v391 = vld [vmem:[%s3 + $0x168] sm:$0xff]
  %v392 = vld [vmem:[%s3 + $0x170] sm:$0xff]
  %v393 = vld [vmem:[%s3 + $0x178] sm:$0xff]
  %v394 = vld [vmem:[%s3 + $0x180] sm:$0xff]
  %v395 = vld [vmem:[%s3 + $0x188] sm:$0xff]
  %v396 = vld [vmem:[%s3 + $0x190] sm:$0xff]
  %v397 = vld [vmem:[%s3 + $0x198] sm:$0xff]
  %v398 = vld [vmem:[%s3 + $0x1a0] sm:$0xff]
  %v399 = vld [vmem:[%s3 + $0x1a8] sm:$0xff]
  %v400 = vld [vmem:[%s3 + $0x1b0] sm:$0xff]
  %v401 = vld [vmem:[%s3 + $0x1b8] sm:$0xff]
  %v402 = vld [vmem:[%s3 + $0x1c0] sm:$0xff]
  %v403 = vld [vmem:[%s3 + $0x1c8] sm:$0xff]
  %v404 = vld [vmem:[%s3 + $0x1d0] sm:$0xff]
  %v405 = vld [vmem:[%s3 + $0x1d8] sm:$0xff]
  %v406 = vld [vmem:[%s3 + $0x1e0] sm:$0xff]
  %v407 = vld [vmem:[%s3 + $0x1e8] sm:$0xff]
  %v408 = vld [vmem:[%s3 + $0x1f0] sm:$0xff]
  %v409 = vld [vmem:[%s3 + $0x1f8] sm:$0xff]
  %v410 = vld [vmem:[#allocation2] sm:$0xff]
  %v411 = vld [vmem:[#allocation3] sm:$0xff]
  %v412 = vld [vmem:[#allocation4] sm:$0xff]
  %v413 = vld [vmem:[#allocation4 + $0x8] sm:$0xff]
  %v414 = vld [vmem:[#allocation4 + $0x10] sm:$0xff]
  %v415 = vld [vmem:[#allocation4 + $0x18] sm:$0xff]
  %416 = vmatprep.subr.mxu0 %v347
  %417 = vmatpush1.msra.mxu0 %v346
  %418 = vmatprep.subr.mxu0 %v351
  %419 = vmatpush1.msra.mxu0 %v350
  %420 = vmatprep.subr.mxu0 %v355
  %421 = vmatpush1.msra.mxu0 %v354
  %422 = vmatprep.subr.mxu0 %v359
  %423 = vmatpush1.msra.mxu0 %v358
  %424 = vmatprep.subr.mxu0 %v363
  %425 = vmatpush1.msra.mxu0 %v362
  %426 = vmatprep.subr.mxu0 %v367
  %427 = vmatpush1.msra.mxu0 %v366
  %428 = vmatprep.subr.mxu0 %v371
  %429 = vmatpush1.msra.mxu0 %v370
  %430 = vmatprep.subr.mxu0 %v375
  %431 = vmatpush1.msra.mxu0 %v374
  %432 = vmatprep.subr.mxu0 %v379
  %433 = vmatpush1.msra.mxu0 %v378
  %434 = vmatprep.subr.mxu0 %v383
  %435 = vmatpush1.msra.mxu0 %v382
  %436 = vmatprep.subr.mxu0 %v387
  %437 = vmatpush1.msra.mxu0 %v386
  %438 = vmatprep.subr.mxu0 %v391
  %439 = vmatpush1.msra.mxu0 %v390
  %440 = vmatprep.subr.mxu0 %v395
  %441 = vmatpush1.msra.mxu0 %v394
  %442 = vmatprep.subr.mxu0 %v399
  %443 = vmatpush1.msra.mxu0 %v398
  %444 = vmatprep.subr.mxu0 %v403
  %445 = vmatpush1.msra.mxu0 %v402
  %446 = vmatprep.subr.mxu0 %v407
  %447 = vmatpush1.msra.mxu0 %v406
  %448 = vmatprep.subr.mxu0 0.0
  %449 = vmatpush1.msra.mxu0 0.0
  %450 = vmatprep.subr.mxu0 0.0
  %451 = vmatpush1.msra.mxu0 0.0
  %452 = vmatprep.subr.mxu0 0.0
  %453 = vmatpush1.msra.mxu0 0.0
  %454 = vmatprep.subr.mxu0 0.0
  %455 = vmatpush1.msra.mxu0 0.0
  %456 = vmatprep.subr.mxu0 0.0
  %457 = vmatpush1.msra.mxu0 0.0
  %458 = vmatprep.subr.mxu0 0.0
  %459 = vmatpush1.msra.mxu0 0.0
  %460 = vmatprep.subr.mxu0 0.0
  %461 = vmatpush1.msra.mxu0 0.0
  %462 = vmatprep.subr.mxu0 0.0
  %463 = vmatpush1.msra.mxu0 0.0
  %464 = vmatprep.subr.mxu0 0.0
  %465 = vmatpush1.msra.mxu0 0.0
  %466 = vmatprep.subr.mxu0 0.0
  %467 = vmatpush1.msra.mxu0 0.0
  %468 = vmatprep.subr.mxu0 0.0
  %469 = vmatpush1.msra.mxu0 0.0
  %470 = vmatprep.subr.mxu0 0.0
  %471 = vmatpush1.msra.mxu0 0.0
  %472 = vmatprep.subr.mxu0 0.0
  %473 = vmatpush1.msra.mxu0 0.0
  %474 = vmatprep.subr.mxu0 0.0
  %475 = vmatpush1.msra.mxu0 0.0
  %476 = vmatprep.subr.mxu0 0.0
  %477 = vmatpush1.msra.mxu0 0.0
  %478 = vmatprep.subr.mxu0 0.0
  %479 = vmatpush1.msra.mxu0 0.0
  %480 = vmatprep.mubr.f32.mxu0 0.0
  %481 = vmatmul.mubr.f32.gmra.mrb[0].mxu0 %v410
  %v482 = vpop.f32.mrb[0].mxu0
  %v483 = vadd.f32 0.0, %v482
  %v484 = vpop.f32.mrb[0].mxu0
  %v485 = vadd.f32 0.0, %v484
  %486 = vdwg.mxu0
  %487 = vmatprep.subr.mxu0 %v349
  %488 = vmatpush1.msra.mxu0 %v348
  %489 = vmatprep.subr.mxu0 %v353
  %490 = vmatpush1.msra.mxu0 %v352
  %491 = vmatprep.subr.mxu0 %v357
  %492 = vmatpush1.msra.mxu0 %v356
  %493 = vmatprep.subr.mxu0 %v361
  %494 = vmatpush1.msra.mxu0 %v360
  %495 = vmatprep.subr.mxu0 %v365
  %496 = vmatpush1.msra.mxu0 %v364
  %497 = vmatprep.subr.mxu0 %v369
  %498 = vmatpush1.msra.mxu0 %v368
  %499 = vmatprep.subr.mxu0 %v373
  %500 = vmatpush1.msra.mxu0 %v372
  %501 = vmatprep.subr.mxu0 %v377
  %502 = vmatpush1.msra.mxu0 %v376
  %503 = vmatprep.subr.mxu0 %v381
  %504 = vmatpush1.msra.mxu0 %v380
  %505 = vmatprep.subr.mxu0 %v385
  %506 = vmatpush1.msra.mxu0 %v384
  %507 = vmatprep.subr.mxu0 %v389
  %508 = vmatpush1.msra.mxu0 %v388
  %509 = vmatprep.subr.mxu0 %v393
  %510 = vmatpush1.msra.mxu0 %v392
  %511 = vmatprep.subr.mxu0 %v397
  %512 = vmatpush1.msra.mxu0 %v396
  %513 = vmatprep.subr.mxu0 %v401
  %514 = vmatpush1.msra.mxu0 %v400
  %515 = vmatprep.subr.mxu0 %v405
  %516 = vmatpush1.msra.mxu0 %v404
  %517 = vmatprep.subr.mxu0 %v409
  %518 = vmatpush1.msra.mxu0 %v408
  %519 = vmatprep.subr.mxu0 0.0
  %520 = vmatpush1.msra.mxu0 0.0
  %521 = vmatprep.subr.mxu0 0.0
  %522 = vmatpush1.msra.mxu0 0.0
  %523 = vmatprep.subr.mxu0 0.0
  %524 = vmatpush1.msra.mxu0 0.0
  %525 = vmatprep.subr.mxu0 0.0
  %526 = vmatpush1.msra.mxu0 0.0
  %527 = vmatprep.subr.mxu0 0.0
  %528 = vmatpush1.msra.mxu0 0.0
  %529 = vmatprep.subr.mxu0 0.0
  %530 = vmatpush1.msra.mxu0 0.0
  %531 = vmatprep.subr.mxu0 0.0
  %532 = vmatpush1.msra.mxu0 0.0
  %533 = vmatprep.subr.mxu0 0.0
  %534 = vmatpush1.msra.mxu0 0.0
  %535 = vmatprep.subr.mxu0 0.0
  %536 = vmatpush1.msra.mxu0 0.0
  %537 = vmatprep.subr.mxu0 0.0
  %538 = vmatpush1.msra.mxu0 0.0
  %539 = vmatprep.subr.mxu0 0.0
  %540 = vmatpush1.msra.mxu0 0.0
  %541 = vmatprep.subr.mxu0 0.0
  %542 = vmatpush1.msra.mxu0 0.0
  %543 = vmatprep.subr.mxu0 0.0
  %544 = vmatpush1.msra.mxu0 0.0
  %545 = vmatprep.subr.mxu0 0.0
  %546 = vmatpush1.msra.mxu0 0.0
  %547 = vmatprep.subr.mxu0 0.0
  %548 = vmatpush1.msra.mxu0 0.0
  %549 = vmatprep.subr.mxu0 0.0
  %550 = vmatpush1.msra.mxu0 0.0
  %551 = vmatprep.mubr.f32.mxu0 0.0
  %552 = vmatmul.mubr.f32.gmra.mrb[0].mxu0 %v410
  %v553 = vpop.f32.mrb[0].mxu0
  %v554 = vadd.f32 0.0, %v553
  %v555 = vpop.f32.mrb[0].mxu0
  %v556 = vadd.f32 0.0, %v555
  %557 = vdwg.mxu0
  %v558 = vadd.f32 %v412, %v483
  %v559 = vadd.f32 %v413, %v485
  %v560 = vadd.f32 %v414, %v554
  %v561 = vadd.f32 %v415, %v556
  %v562 = vxor.u32 %v558, 2147483648
  %v563 = vmul.f32 %v562, 1.442695
  %v564 = vpow.pop %v563
  %v565 = vadd.f32 %v564, 1.0
  %v566 = vrcp.pop %v565
  %v567 = vmul.f32 1.0, %v566
  %v568 = vxor.u32 %v559, 2147483648
  %v569 = vmul.f32 %v568, 1.442695
  %v570 = vpow.pop %v569
  %v571 = vadd.f32 %v570, 1.0
  %v572 = vrcp.pop %v571
  %v573 = vmul.f32 1.0, %v572
  %v574 = vtanh.pop %v560
  %v575 = vxor.u32 %v561, 2147483648
  %v576 = vmul.f32 %v575, 1.442695
  %v577 = vpow.pop %v576
  %v578 = vadd.f32 %v577, 1.0
  %v579 = vrcp.pop %v578
  %v580 = vmul.f32 1.0, %v579
  %v581 = vmul.f32 %v573, %v411
  %v582 = vmul.f32 %v567, %v574
  %v583 = vadd.f32 %v581, %v582
  %v584 = vtanh.pop %v583
  %v585 = vmul.f32 %v580, %v584
  %586 = vst [vmem:[#allocation5] sm:$0xff] %v585
  %s587 = scalar_lea.vmem [#allocation4], 32
  %v588 = vld [vmem:[%s587] sm:$0xff]
  %v589 = vld [vmem:[%s587 + $0x8] sm:$0xff]
  %v590 = vld [vmem:[%s587 + $0x10] sm:$0xff]
  %v591 = vld [vmem:[%s587 + $0x18] sm:$0xff]
  %592 = vmatprep.subr.mxu0 %v347
  %593 = vmatpush1.msra.mxu0 %v346
  %594 = vmatprep.subr.mxu0 %v351
  %595 = vmatpush1.msra.mxu0 %v350
  %596 = vmatprep.subr.mxu0 %v355
  %597 = vmatpush1.msra.mxu0 %v354
  %598 = vmatprep.subr.mxu0 %v359
  %599 = vmatpush1.msra.mxu0 %v358
  %600 = vmatprep.subr.mxu0 %v363
  %601 = vmatpush1.msra.mxu0 %v362
  %602 = vmatprep.subr.mxu0 %v367
  %603 = vmatpush1.msra.mxu0 %v366
  %604 = vmatprep.subr.mxu0 %v371
  %605 = vmatpush1.msra.mxu0 %v370
  %606 = vmatprep.subr.mxu0 %v375
  %607 = vmatpush1.msra.mxu0 %v374
  %608 = vmatprep.subr.mxu0 %v379
  %609 = vmatpush1.msra.mxu0 %v378
  %610 = vmatprep.subr.mxu0 %v383
  %611 = vmatpush1.msra.mxu0 %v382
  %612 = vmatprep.subr.mxu0 %v387
  %613 = vmatpush1.msra.mxu0 %v386
  %614 = vmatprep.subr.mxu0 %v391
  %615 = vmatpush1.msra.mxu0 %v390
  %616 = vmatprep.subr.mxu0 %v395
  %617 = vmatpush1.msra.mxu0 %v394
  %618 = vmatprep.subr.mxu0 %v399
  %619 = vmatpush1.msra.mxu0 %v398
  %620 = vmatprep.subr.mxu0 %v403
  %621 = vmatpush1.msra.mxu0 %v402
  %622 = vmatprep.subr.mxu0 %v407
  %623 = vmatpush1.msra.mxu0 %v406
  %624 = vmatprep.subr.mxu0 0.0
  %625 = vmatpush1.msra.mxu0 0.0
  %626 = vmatprep.subr.mxu0 0.0
  %627 = vmatpush1.msra.mxu0 0.0
  %628 = vmatprep.subr.mxu0 0.0
  %629 = vmatpush1.msra.mxu0 0.0
  %630 = vmatprep.subr.mxu0 0.0
  %631 = vmatpush1.msra.mxu0 0.0
  %632 = vmatprep.subr.mxu0 0.0
  %633 = vmatpush1.msra.mxu0 0.0
  %634 = vmatprep.subr.mxu0 0.0
  %635 = vmatpush1.msra.mxu0 0.0
  %636 = vmatprep.subr.mxu0 0.0
  %637 = vmatpush1.msra.mxu0 0.0
  %638 = vmatprep.subr.mxu0 0.0
  %639 = vmatpush1.msra.mxu0 0.0
  %640 = vmatprep.subr.mxu0 0.0
  %641 = vmatpush1.msra.mxu0 0.0
  %642 = vmatprep.subr.mxu0 0.0
  %643 = vmatpush1.msra.mxu0 0.0
  %644 = vmatprep.subr.mxu0 0.0
  %645 = vmatpush1.msra.mxu0 0.0
  %646 = vmatprep.subr.mxu0 0.0
  %647 = vmatpush1.msra.mxu0 0.0
  %648 = vmatprep.subr.mxu0 0.0
  %649 = vmatpush1.msra.mxu0 0.0
  %650 = vmatprep.subr.mxu0 0.0
  %651 = vmatpush1.msra.mxu0 0.0
  %652 = vmatprep.subr.mxu0 0.0
  %653 = vmatpush1.msra.mxu0 0.0
  %654 = vmatprep.subr.mxu0 0.0
  %655 = vmatpush1.msra.mxu0 0.0
  %656 = vmatprep.mubr.f32.mxu0 0.0
  %657 = vmatmul.mubr.f32.gmra.mrb[0].mxu0 %v585
  %v658 = vpop.f32.mrb[0].mxu0
  %v659 = vadd.f32 0.0, %v658
  %v660 = vpop.f32.mrb[0].mxu0
  %v661 = vadd.f32 0.0, %v660
  %662 = vdwg.mxu0
  %663 = vmatprep.subr.mxu0 %v349
  %664 = vmatpush1.msra.mxu0 %v348
  %665 = vmatprep.subr.mxu0 %v353
  %666 = vmatpush1.msra.mxu0 %v352
  %667 = vmatprep.subr.mxu0 %v357
  %668 = vmatpush1.msra.mxu0 %v356
  %669 = vmatprep.subr.mxu0 %v361
  %670 = vmatpush1.msra.mxu0 %v360
  %671 = vmatprep.subr.mxu0 %v365
  %672 = vmatpush1.msra.mxu0 %v364
  %673 = vmatprep.subr.mxu0 %v369
  %674 = vmatpush1.msra.mxu0 %v368
  %675 = vmatprep.subr.mxu0 %v373
  %676 = vmatpush1.msra.mxu0 %v372
  %677 = vmatprep.subr.mxu0 %v377
  %678 = vmatpush1.msra.mxu0 %v376
  %679 = vmatprep.subr.mxu0 %v381
  %680 = vmatpush1.msra.mxu0 %v380
  %681 = vmatprep.subr.mxu0 %v385
  %682 = vmatpush1.msra.mxu0 %v384
  %683 = vmatprep.subr.mxu0 %v389
  %684 = vmatpush1.msra.mxu0 %v388
  %685 = vmatprep.subr.mxu0 %v393
  %686 = vmatpush1.msra.mxu0 %v392
  %687 = vmatprep.subr.mxu0 %v397
  %688 = vmatpush1.msra.mxu0 %v396
  %689 = vmatprep.subr.mxu0 %v401
  %690 = vmatpush1.msra.mxu0 %v400
  %691 = vmatprep.subr.mxu0 %v405
  %692 = vmatpush1.msra.mxu0 %v404
  %693 = vmatprep.subr.mxu0 %v409
  %694 = vmatpush1.msra.mxu0 %v408
  %695 = vmatprep.subr.mxu0 0.0
  %696 = vmatpush1.msra.mxu0 0.0
  %697 = vmatprep.subr.mxu0 0.0
  %698 = vmatpush1.msra.mxu0 0.0
  %699 = vmatprep.subr.mxu0 0.0
  %700 = vmatpush1.msra.mxu0 0.0
  %701 = vmatprep.subr.mxu0 0.0
  %702 = vmatpush1.msra.mxu0 0.0
  %703 = vmatprep.subr.mxu0 0.0
  %704 = vmatpush1.msra.mxu0 0.0
  %705 = vmatprep.subr.mxu0 0.0
  %706 = vmatpush1.msra.mxu0 0.0
  %707 = vmatprep.subr.mxu0 0.0
  %708 = vmatpush1.msra.mxu0 0.0
  %709 = vmatprep.subr.mxu0 0.0
  %710 = vmatpush1.msra.mxu0 0.0
  %711 = vmatprep.subr.mxu0 0.0
  %712 = vmatpush1.msra.mxu0 0.0
  %713 = vmatprep.subr.mxu0 0.0
  %714 = vmatpush1.msra.mxu0 0.0
  %715 = vmatprep.subr.mxu0 0.0
  %716 = vmatpush1.msra.mxu0 0.0
  %717 = vmatprep.subr.mxu0 0.0
  %718 = vmatpush1.msra.mxu0 0.0
  %719 = vmatprep.subr.mxu0 0.0
  %720 = vmatpush1.msra.mxu0 0.0
  %721 = vmatprep.subr.mxu0 0.0
  %722 = vmatpush1.msra.mxu0 0.0
  %723 = vmatprep.subr.mxu0 0.0
  %724 = vmatpush1.msra.mxu0 0.0
  %725 = vmatprep.subr.mxu0 0.0
  %726 = vmatpush1.msra.mxu0 0.0
  %727 = vmatprep.mubr.f32.mxu0 0.0
  %728 = vmatmul.mubr.f32.gmra.mrb[0].mxu0 %v585
  %v729 = vpop.f32.mrb[0].mxu0
  %v730 = vadd.f32 0.0, %v729
  %v731 = vpop.f32.mrb[0].mxu0
  %v732 = vadd.f32 0.0, %v731
  %733 = vdwg.mxu0
  %v734 = vadd.f32 %v588, %v659
  %v735 = vadd.f32 %v589, %v661
  %v736 = vadd.f32 %v590, %v730
  %v737 = vadd.f32 %v591, %v732
  %v738 = vxor.u32 %v734, 2147483648
  %v739 = vmul.f32 %v738, 1.442695
  %v740 = vpow.pop %v739
  %v741 = vadd.f32 %v740, 1.0
  %v742 = vrcp.pop %v741
  %v743 = vmul.f32 1.0, %v742
  %v744 = vxor.u32 %v735, 2147483648
  %v745 = vmul.f32 %v744, 1.442695
  %v746 = vpow.pop %v745
  %v747 = vadd.f32 %v746, 1.0
  %v748 = vrcp.pop %v747
  %v749 = vmul.f32 1.0, %v748
  %v750 = vtanh.pop %v736
  %v751 = vxor.u32 %v737, 2147483648
  %v752 = vmul.f32 %v751, 1.442695
  %v753 = vpow.pop %v752
  %v754 = vadd.f32 %v753, 1.0
  %v755 = vrcp.pop %v754
  %v756 = vmul.f32 1.0, %v755
  %v757 = vmul.f32 %v749, %v583
  %v758 = vmul.f32 %v743, %v750
  %v759 = vadd.f32 %v757, %v758
  %v760 = vtanh.pop %v759
  %v761 = vmul.f32 %v756, %v760
  %s762 = scalar_lea.vmem [#allocation5], 8
  %763 = vst [vmem:[%s762] sm:$0xff] %v761
  %s764 = scalar_lea.vmem [#allocation4], 64
  %v765 = vld [vmem:[%s764] sm:$0xff]
  %v766 = vld [vmem:[%s764 + $0x8] sm:$0xff]
  %v767 = vld [vmem:[%s764 + $0x10] sm:$0xff]
  %v768 = vld [vmem:[%s764 + $0x18] sm:$0xff]
  %769 = vmatprep.subr.mxu0 %v347
  %770 = vmatpush1.msra.mxu0 %v346
  %771 = vmatprep.subr.mxu0 %v351
  %772 = vmatpush1.msra.mxu0 %v350
  %773 = vmatprep.subr.mxu0 %v355
  %774 = vmatpush1.msra.mxu0 %v354
  %775 = vmatprep.subr.mxu0 %v359
  %776 = vmatpush1.msra.mxu0 %v358
  %777 = vmatprep.subr.mxu0 %v363
  %778 = vmatpush1.msra.mxu0 %v362
  %779 = vmatprep.subr.mxu0 %v367
  %780 = vmatpush1.msra.mxu0 %v366
  %781 = vmatprep.subr.mxu0 %v371
  %782 = vmatpush1.msra.mxu0 %v370
  %783 = vmatprep.subr.mxu0 %v375
  %784 = vmatpush1.msra.mxu0 %v374
  %785 = vmatprep.subr.mxu0 %v379
  %786 = vmatpush1.msra.mxu0 %v378
  %787 = vmatprep.subr.mxu0 %v383
  %788 = vmatpush1.msra.mxu0 %v382
  %789 = vmatprep.subr.mxu0 %v387
  %790 = vmatpush1.msra.mxu0 %v386
  %791 = vmatprep.subr.mxu0 %v391
  %792 = vmatpush1.msra.mxu0 %v390
  %793 = vmatprep.subr.mxu0 %v395
  %794 = vmatpush1.msra.mxu0 %v394
  %795 = vmatprep.subr.mxu0 %v399
  %796 = vmatpush1.msra.mxu0 %v398
  %797 = vmatprep.subr.mxu0 %v403
  %798 = vmatpush1.msra.mxu0 %v402
  %799 = vmatprep.subr.mxu0 %v407
  %800 = vmatpush1.msra.mxu0 %v406
  %801 = vmatprep.subr.mxu0 0.0
  %802 = vmatpush1.msra.mxu0 0.0
  %803 = vmatprep.subr.mxu0 0.0
  %804 = vmatpush1.msra.mxu0 0.0
  %805 = vmatprep.subr.mxu0 0.0
  %806 = vmatpush1.msra.mxu0 0.0
  %807 = vmatprep.subr.mxu0 0.0
  %808 = vmatpush1.msra.mxu0 0.0
  %809 = vmatprep.subr.mxu0 0.0
  %810 = vmatpush1.msra.mxu0 0.0
  %811 = vmatprep.subr.mxu0 0.0
  %812 = vmatpush1.msra.mxu0 0.0
  %813 = vmatprep.subr.mxu0 0.0
  %814 = vmatpush1.msra.mxu0 0.0
  %815 = vmatprep.subr.mxu0 0.0
  %816 = vmatpush1.msra.mxu0 0.0
  %817 = vmatprep.subr.mxu0 0.0
  %818 = vmatpush1.msra.mxu0 0.0
  %819 = vmatprep.subr.mxu0 0.0
  %820 = vmatpush1.msra.mxu0 0.0
  %821 = vmatprep.subr.mxu0 0.0
  %822 = vmatpush1.msra.mxu0 0.0
  %823 = vmatprep.subr.mxu0 0.0
  %824 = vmatpush1.msra.mxu0 0.0
  %825 = vmatprep.subr.mxu0 0.0
  %826 = vmatpush1.msra.mxu0 0.0
  %827 = vmatprep.subr.mxu0 0.0
  %828 = vmatpush1.msra.mxu0 0.0
  %829 = vmatprep.subr.mxu0 0.0
  %830 = vmatpush1.msra.mxu0 0.0
  %831 = vmatprep.subr.mxu0 0.0
  %832 = vmatpush1.msra.mxu0 0.0
  %833 = vmatprep.mubr.f32.mxu0 0.0
  %834 = vmatmul.mubr.f32.gmra.mrb[0].mxu0 %v761
  %v835 = vpop.f32.mrb[0].mxu0
  %v836 = vadd.f32 0.0, %v835
  %v837 = vpop.f32.mrb[0].mxu0
  %v838 = vadd.f32 0.0, %v837
  %839 = vdwg.mxu0
  %840 = vmatprep.subr.mxu0 %v349
  %841 = vmatpush1.msra.mxu0 %v348
  %842 = vmatprep.subr.mxu0 %v353
  %843 = vmatpush1.msra.mxu0 %v352
  %844 = vmatprep.subr.mxu0 %v357
  %845 = vmatpush1.msra.mxu0 %v356
  %846 = vmatprep.subr.mxu0 %v361
  %847 = vmatpush1.msra.mxu0 %v360
  %848 = vmatprep.subr.mxu0 %v365
  %849 = vmatpush1.msra.mxu0 %v364
  %850 = vmatprep.subr.mxu0 %v369
  %851 = vmatpush1.msra.mxu0 %v368
  %852 = vmatprep.subr.mxu0 %v373
  %853 = vmatpush1.msra.mxu0 %v372
  %854 = vmatprep.subr.mxu0 %v377
  %855 = vmatpush1.msra.mxu0 %v376
  %856 = vmatprep.subr.mxu0 %v381
  %857 = vmatpush1.msra.mxu0 %v380
  %858 = vmatprep.subr.mxu0 %v385
  %859 = vmatpush1.msra.mxu0 %v384
  %860 = vmatprep.subr.mxu0 %v389
  %861 = vmatpush1.msra.mxu0 %v388
  %862 = vmatprep.subr.mxu0 %v393
  %863 = vmatpush1.msra.mxu0 %v392
  %864 = vmatprep.subr.mxu0 %v397
  %865 = vmatpush1.msra.mxu0 %v396
  %866 = vmatprep.subr.mxu0 %v401
  %867 = vmatpush1.msra.mxu0 %v400
  %868 = vmatprep.subr.mxu0 %v405
  %869 = vmatpush1.msra.mxu0 %v404
  %870 = vmatprep.subr.mxu0 %v409
  %871 = vmatpush1.msra.mxu0 %v408
  %872 = vmatprep.subr.mxu0 0.0
  %873 = vmatpush1.msra.mxu0 0.0
  %874 = vmatprep.subr.mxu0 0.0
  %875 = vmatpush1.msra.mxu0 0.0
  %876 = vmatprep.subr.mxu0 0.0
  %877 = vmatpush1.msra.mxu0 0.0
  %878 = vmatprep.subr.mxu0 0.0
  %879 = vmatpush1.msra.mxu0 0.0
  %880 = vmatprep.subr.mxu0 0.0
  %881 = vmatpush1.msra.mxu0 0.0
  %882 = vmatprep.subr.mxu0 0.0
  %883 = vmatpush1.msra.mxu0 0.0
  %884 = vmatprep.subr.mxu0 0.0
  %885 = vmatpush1.msra.mxu0 0.0
  %886 = vmatprep.subr.mxu0 0.0
  %887 = vmatpush1.msra.mxu0 0.0
  %888 = vmatprep.subr.mxu0 0.0
  %889 = vmatpush1.msra.mxu0 0.0
  %890 = vmatprep.subr.mxu0 0.0
  %891 = vmatpush1.msra.mxu0 0.0
  %892 = vmatprep.subr.mxu0 0.0
  %893 = vmatpush1.msra.mxu0 0.0
  %894 = vmatprep.subr.mxu0 0.0
  %895 = vmatpush1.msra.mxu0 0.0
  %896 = vmatprep.subr.mxu0 0.0
  %897 = vmatpush1.msra.mxu0 0.0
  %898 = vmatprep.subr.mxu0 0.0
  %899 = vmatpush1.msra.mxu0 0.0
  %900 = vmatprep.subr.mxu0 0.0
  %901 = vmatpush1.msra.mxu0 0.0
  %902 = vmatprep.subr.mxu0 0.0
  %903 = vmatpush1.msra.mxu0 0.0
  %904 = vmatprep.mubr.f32.mxu0 0.0
  %905 = vmatmul.mubr.f32.gmra.mrb[0].mxu0 %v761
  %v906 = vpop.f32.mrb[0].mxu0
  %v907 = vadd.f32 0.0, %v906
  %v908 = vpop.f32.mrb[0].mxu0
  %v909 = vadd.f32 0.0, %v908
  %910 = vdwg.mxu0
  %v911 = vadd.f32 %v765, %v836
  %v912 = vadd.f32 %v766, %v838
  %v913 = vadd.f32 %v767, %v907
  %v914 = vadd.f32 %v768, %v909
  %v915 = vxor.u32 %v911, 2147483648
  %v916 = vmul.f32 %v915, 1.442695
  %v917 = vpow.pop %v916
  %v918 = vadd.f32 %v917, 1.0
  %v919 = vrcp.pop %v918
  %v920 = vmul.f32 1.0, %v919
  %v921 = vxor.u32 %v912, 2147483648
  %v922 = vmul.f32 %v921, 1.442695
  %v923 = vpow.pop %v922
  %v924 = vadd.f32 %v923, 1.0
  %v925 = vrcp.pop %v924
  %v926 = vmul.f32 1.0, %v925
  %v927 = vtanh.pop %v913
  %v928 = vxor.u32 %v914, 2147483648
  %v929 = vmul.f32 %v928, 1.442695
  %v930 = vpow.pop %v929
  %v931 = vadd.f32 %v930, 1.0
  %v932 = vrcp.pop %v931
  %v933 = vmul.f32 1.0, %v932
  %v934 = vmul.f32 %v926, %v759
  %v935 = vmul.f32 %v920, %v927
  %v936 = vadd.f32 %v934, %v935
  %v937 = vtanh.pop %v936
  %v938 = vmul.f32 %v933, %v937
  %s939 = scalar_lea.vmem [#allocation5], 16
  %940 = vst [vmem:[%s939] sm:$0xff] %v938
  %s941 = scalar_lea.vmem [#allocation4], 96
  %v942 = vld [vmem:[%s941] sm:$0xff]
  %v943 = vld [vmem:[%s941 + $0x8] sm:$0xff]
  %v944 = vld [vmem:[%s941 + $0x10] sm:$0xff]
  %v945 = vld [vmem:[%s941 + $0x18] sm:$0xff]
  %946 = vmatprep.subr.mxu0 %v347
  %947 = vmatpush1.msra.mxu0 %v346
  %948 = vmatprep.subr.mxu0 %v351
  %949 = vmatpush1.msra.mxu0 %v350
  %950 = vmatprep.subr.mxu0 %v355
  %951 = vmatpush1.msra.mxu0 %v354
  %952 = vmatprep.subr.mxu0 %v359
  %953 = vmatpush1.msra.mxu0 %v358
  %954 = vmatprep.subr.mxu0 %v363
  %955 = vmatpush1.msra.mxu0 %v362
  %956 = vmatprep.subr.mxu0 %v367
  %957 = vmatpush1.msra.mxu0 %v366
  %958 = vmatprep.subr.mxu0 %v371
  %959 = vmatpush1.msra.mxu0 %v370
  %960 = vmatprep.subr.mxu0 %v375
  %961 = vmatpush1.msra.mxu0 %v374
  %962 = vmatprep.subr.mxu0 %v379
  %963 = vmatpush1.msra.mxu0 %v378
  %964 = vmatprep.subr.mxu0 %v383
  %965 = vmatpush1.msra.mxu0 %v382
  %966 = vmatprep.subr.mxu0 %v387
  %967 = vmatpush1.msra.mxu0 %v386
  %968 = vmatprep.subr.mxu0 %v391
  %969 = vmatpush1.msra.mxu0 %v390
  %970 = vmatprep.subr.mxu0 %v395
  %971 = vmatpush1.msra.mxu0 %v394
  %972 = vmatprep.subr.mxu0 %v399
  %973 = vmatpush1.msra.mxu0 %v398
  %974 = vmatprep.subr.mxu0 %v403
  %975 = vmatpush1.msra.mxu0 %v402
  %976 = vmatprep.subr.mxu0 %v407
  %977 = vmatpush1.msra.mxu0 %v406
  %978 = vmatprep.subr.mxu0 0.0
  %979 = vmatpush1.msra.mxu0 0.0
  %980 = vmatprep.subr.mxu0 0.0
  %981 = vmatpush1.msra.mxu0 0.0
  %982 = vmatprep.subr.mxu0 0.0
  %983 = vmatpush1.msra.mxu0 0.0
  %984 = vmatprep.subr.mxu0 0.0
  %985 = vmatpush1.msra.mxu0 0.0
  %986 = vmatprep.subr.mxu0 0.0
  %987 = vmatpush1.msra.mxu0 0.0
  %988 = vmatprep.subr.mxu0 0.0
  %989 = vmatpush1.msra.mxu0 0.0
  %990 = vmatprep.subr.mxu0 0.0
  %991 = vmatpush1.msra.mxu0 0.0
  %992 = vmatprep.subr.mxu0 0.0
  %993 = vmatpush1.msra.mxu0 0.0
  %994 = vmatprep.subr.mxu0 0.0
  %995 = vmatpush1.msra.mxu0 0.0
  %996 = vmatprep.subr.mxu0 0.0
  %997 = vmatpush1.msra.mxu0 0.0
  %998 = vmatprep.subr.mxu0 0.0
  %999 = vmatpush1.msra.mxu0 0.0
  %1000 = vmatprep.subr.mxu0 0.0
  %1001 = vmatpush1.msra.mxu0 0.0
  %1002 = vmatprep.subr.mxu0 0.0
  %1003 = vmatpush1.msra.mxu0 0.0
  %1004 = vmatprep.subr.mxu0 0.0
  %1005 = vmatpush1.msra.mxu0 0.0
  %1006 = vmatprep.subr.mxu0 0.0
  %1007 = vmatpush1.msra.mxu0 0.0
  %1008 = vmatprep.subr.mxu0 0.0
  %1009 = vmatpush1.msra.mxu0 0.0
  %1010 = vmatprep.mubr.f32.mxu0 0.0
  %1011 = vmatmul.mubr.f32.gmra.mrb[0].mxu0 %v938
  %v1012 = vpop.f32.mrb[0].mxu0
  %v1013 = vadd.f32 0.0, %v1012
  %v1014 = vpop.f32.mrb[0].mxu0
  %v1015 = vadd.f32 0.0, %v1014
  %1016 = vdwg.mxu0
  %1017 = vmatprep.subr.mxu0 %v349
  %1018 = vmatpush1.msra.mxu0 %v348
  %1019 = vmatprep.subr.mxu0 %v353
  %1020 = vmatpush1.msra.mxu0 %v352
  %1021 = vmatprep.subr.mxu0 %v357
  %1022 = vmatpush1.msra.mxu0 %v356
  %1023 = vmatprep.subr.mxu0 %v361
  %1024 = vmatpush1.msra.mxu0 %v360
  %1025 = vmatprep.subr.mxu0 %v365
  %1026 = vmatpush1.msra.mxu0 %v364
  %1027 = vmatprep.subr.mxu0 %v369
  %1028 = vmatpush1.msra.mxu0 %v368
  %1029 = vmatprep.subr.mxu0 %v373
  %1030 = vmatpush1.msra.mxu0 %v372
  %1031 = vmatprep.subr.mxu0 %v377
  %1032 = vmatpush1.msra.mxu0 %v376
  %1033 = vmatprep.subr.mxu0 %v381
  %1034 = vmatpush1.msra.mxu0 %v380
  %1035 = vmatprep.subr.mxu0 %v385
  %1036 = vmatpush1.msra.mxu0 %v384
  %1037 = vmatprep.subr.mxu0 %v389
  %1038 = vmatpush1.msra.mxu0 %v388
  %1039 = vmatprep.subr.mxu0 %v393
  %1040 = vmatpush1.msra.mxu0 %v392
  %1041 = vmatprep.subr.mxu0 %v397
  %1042 = vmatpush1.msra.mxu0 %v396
  %1043 = vmatprep.subr.mxu0 %v401
  %1044 = vmatpush1.msra.mxu0 %v400
  %1045 = vmatprep.subr.mxu0 %v405
  %1046 = vmatpush1.msra.mxu0 %v404
  %1047 = vmatprep.subr.mxu0 %v409
  %1048 = vmatpush1.msra.mxu0 %v408
  %1049 = vmatprep.subr.mxu0 0.0
  %1050 = vmatpush1.msra.mxu0 0.0
  %1051 = vmatprep.subr.mxu0 0.0
  %1052 = vmatpush1.msra.mxu0 0.0
  %1053 = vmatprep.subr.mxu0 0.0
  %1054 = vmatpush1.msra.mxu0 0.0
  %1055 = vmatprep.subr.mxu0 0.0
  %1056 = vmatpush1.msra.mxu0 0.0
  %1057 = vmatprep.subr.mxu0 0.0
  %1058 = vmatpush1.msra.mxu0 0.0
  %1059 = vmatprep.subr.mxu0 0.0
  %1060 = vmatpush1.msra.mxu0 0.0
  %1061 = vmatprep.subr.mxu0 0.0
  %1062 = vmatpush1.msra.mxu0 0.0
  %1063 = vmatprep.subr.mxu0 0.0
  %1064 = vmatpush1.msra.mxu0 0.0
  %1065 = vmatprep.subr.mxu0 0.0
  %1066 = vmatpush1.msra.mxu0 0.0
  %1067 = vmatprep.subr.mxu0 0.0
  %1068 = vmatpush1.msra.mxu0 0.0
  %1069 = vmatprep.subr.mxu0 0.0
  %1070 = vmatpush1.msra.mxu0 0.0
  %1071 = vmatprep.subr.mxu0 0.0
  %1072 = vmatpush1.msra.mxu0 0.0
  %1073 = vmatprep.subr.mxu0 0.0
  %1074 = vmatpush1.msra.mxu0 0.0
  %1075 = vmatprep.subr.mxu0 0.0
  %1076 = vmatpush1.msra.mxu0 0.0
  %1077 = vmatprep.subr.mxu0 0.0
  %1078 = vmatpush1.msra.mxu0 0.0
  %1079 = vmatprep.subr.mxu0 0.0
  %1080 = vmatpush1.msra.mxu0 0.0
  %1081 = vmatprep.mubr.f32.mxu0 0.0
  %1082 = vmatmul.mubr.f32.gmra.mrb[0].mxu0 %v938
  %v1083 = vpop.f32.mrb[0].mxu0
  %v1084 = vadd.f32 0.0, %v1083
  %v1085 = vpop.f32.mrb[0].mxu0
  %v1086 = vadd.f32 0.0, %v1085
  %1087 = vdwg.mxu0
  %v1088 = vadd.f32 %v942, %v1013
  %v1089 = vadd.f32 %v943, %v1015
  %v1090 = vadd.f32 %v944, %v1084
  %v1091 = vadd.f32 %v945, %v1086
  %v1092 = vxor.u32 %v1088, 2147483648
  %v1093 = vmul.f32 %v1092, 1.442695
  %v1094 = vpow.pop %v1093
  %v1095 = vadd.f32 %v1094, 1.0
  %v1096 = vrcp.pop %v1095
  %v1097 = vmul.f32 1.0, %v1096
  %v1098 = vxor.u32 %v1089, 2147483648
  %v1099 = vmul.f32 %v1098, 1.442695
  %v1100 = vpow.pop %v1099
  %v1101 = vadd.f32 %v1100, 1.0
  %v1102 = vrcp.pop %v1101
  %v1103 = vmul.f32 1.0, %v1102
  %v1104 = vtanh.pop %v1090
  %v1105 = vxor.u32 %v1091, 2147483648
  %v1106 = vmul.f32 %v1105, 1.442695
  %v1107 = vpow.pop %v1106
  %v1108 = vadd.f32 %v1107, 1.0
  %v1109 = vrcp.pop %v1108
  %v1110 = vmul.f32 1.0, %v1109
  %v1111 = vmul.f32 %v1103, %v936
  %v1112 = vmul.f32 %v1097, %v1104
  %v1113 = vadd.f32 %v1111, %v1112
  %v1114 = vtanh.pop %v1113
  %v1115 = vmul.f32 %v1110, %v1114
  %s1116 = scalar_lea.vmem [#allocation5], 24
  %1117 = vst [vmem:[%s1116] sm:$0xff] %v1115
  %s1118 = scalar_lea.vmem [#allocation4], 128
  %v1119 = vld [vmem:[%s1118] sm:$0xff]
  %v1120 = vld [vmem:[%s1118 + $0x8] sm:$0xff]
  %v1121 = vld [vmem:[%s1118 + $0x10] sm:$0xff]
  %v1122 = vld [vmem:[%s1118 + $0x18] sm:$0xff]
  %1123 = vmatprep.subr.mxu0 %v347
  %1124 = vmatpush1.msra.mxu0 %v346
  %1125 = vmatprep.subr.mxu0 %v351
  %1126 = vmatpush1.msra.mxu0 %v350
  %1127 = vmatprep.subr.mxu0 %v355
  %1128 = vmatpush1.msra.mxu0 %v354
  %1129 = vmatprep.subr.mxu0 %v359
  %1130 = vmatpush1.msra.mxu0 %v358
  %1131 = vmatprep.subr.mxu0 %v363
  %1132 = vmatpush1.msra.mxu0 %v362
  %1133 = vmatprep.subr.mxu0 %v367
  %1134 = vmatpush1.msra.mxu0 %v366
  %1135 = vmatprep.subr.mxu0 %v371
  %1136 = vmatpush1.msra.mxu0 %v370
  %1137 = vmatprep.subr.mxu0 %v375
  %1138 = vmatpush1.msra.mxu0 %v374
  %1139 = vmatprep.subr.mxu0 %v379
  %1140 = vmatpush1.msra.mxu0 %v378
  %1141 = vmatprep.subr.mxu0 %v383
  %1142 = vmatpush1.msra.mxu0 %v382
  %1143 = vmatprep.subr.mxu0 %v387
  %1144 = vmatpush1.msra.mxu0 %v386
  %1145 = vmatprep.subr.mxu0 %v391
  %1146 = vmatpush1.msra.mxu0 %v390
  %1147 = vmatprep.subr.mxu0 %v395
  %1148 = vmatpush1.msra.mxu0 %v394
  %1149 = vmatprep.subr.mxu0 %v399
  %1150 = vmatpush1.msra.mxu0 %v398
  %1151 = vmatprep.subr.mxu0 %v403
  %1152 = vmatpush1.msra.mxu0 %v402
  %1153 = vmatprep.subr.mxu0 %v407
  %1154 = vmatpush1.msra.mxu0 %v406
  %1155 = vmatprep.subr.mxu0 0.0
  %1156 = vmatpush1.msra.mxu0 0.0
  %1157 = vmatprep.subr.mxu0 0.0
  %1158 = vmatpush1.msra.mxu0 0.0
  %1159 = vmatprep.subr.mxu0 0.0
  %1160 = vmatpush1.msra.mxu0 0.0
  %1161 = vmatprep.subr.mxu0 0.0
  %1162 = vmatpush1.msra.mxu0 0.0
  %1163 = vmatprep.subr.mxu0 0.0
  %1164 = vmatpush1.msra.mxu0 0.0
  %1165 = vmatprep.subr.mxu0 0.0
  %1166 = vmatpush1.msra.mxu0 0.0
  %1167 = vmatprep.subr.mxu0 0.0
  %1168 = vmatpush1.msra.mxu0 0.0
  %1169 = vmatprep.subr.mxu0 0.0
  %1170 = vmatpush1.msra.mxu0 0.0
  %1171 = vmatprep.subr.mxu0 0.0
  %1172 = vmatpush1.msra.mxu0 0.0
  %1173 = vmatprep.subr.mxu0 0.0
  %1174 = vmatpush1.msra.mxu0 0.0
  %1175 = vmatprep.subr.mxu0 0.0
  %1176 = vmatpush1.msra.mxu0 0.0
  %1177 = vmatprep.subr.mxu0 0.0
  %1178 = vmatpush1.msra.mxu0 0.0
  %1179 = vmatprep.subr.mxu0 0.0
  %1180 = vmatpush1.msra.mxu0 0.0
  %1181 = vmatprep.subr.mxu0 0.0
  %1182 = vmatpush1.msra.mxu0 0.0
  %1183 = vmatprep.subr.mxu0 0.0
  %1184 = vmatpush1.msra.mxu0 0.0
  %1185 = vmatprep.subr.mxu0 0.0
  %1186 = vmatpush1.msra.mxu0 0.0
  %1187 = vmatprep.mubr.f32.mxu0 0.0
  %1188 = vmatmul.mubr.f32.gmra.mrb[0].mxu0 %v1115
  %v1189 = vpop.f32.mrb[0].mxu0
  %v1190 = vadd.f32 0.0, %v1189
  %v1191 = vpop.f32.mrb[0].mxu0
  %v1192 = vadd.f32 0.0, %v1191
  %1193 = vdwg.mxu0
  %1194 = vmatprep.subr.mxu0 %v349
  %1195 = vmatpush1.msra.mxu0 %v348
  %1196 = vmatprep.subr.mxu0 %v353
  %1197 = vmatpush1.msra.mxu0 %v352
  %1198 = vmatprep.subr.mxu0 %v357
  %1199 = vmatpush1.msra.mxu0 %v356
  %1200 = vmatprep.subr.mxu0 %v361
  %1201 = vmatpush1.msra.mxu0 %v360
  %1202 = vmatprep.subr.mxu0 %v365
  %1203 = vmatpush1.msra.mxu0 %v364
  %1204 = vmatprep.subr.mxu0 %v369
  %1205 = vmatpush1.msra.mxu0 %v368
  %1206 = vmatprep.subr.mxu0 %v373
  %1207 = vmatpush1.msra.mxu0 %v372
  %1208 = vmatprep.subr.mxu0 %v377
  %1209 = vmatpush1.msra.mxu0 %v376
  %1210 = vmatprep.subr.mxu0 %v381
  %1211 = vmatpush1.msra.mxu0 %v380
  %1212 = vmatprep.subr.mxu0 %v385
  %1213 = vmatpush1.msra.mxu0 %v384
  %1214 = vmatprep.subr.mxu0 %v389
  %1215 = vmatpush1.msra.mxu0 %v388
  %1216 = vmatprep.subr.mxu0 %v393
  %1217 = vmatpush1.msra.mxu0 %v392
  %1218 = vmatprep.subr.mxu0 %v397
  %1219 = vmatpush1.msra.mxu0 %v396
  %1220 = vmatprep.subr.mxu0 %v401
  %1221 = vmatpush1.msra.mxu0 %v400
  %1222 = vmatprep.subr.mxu0 %v405
  %1223 = vmatpush1.msra.mxu0 %v404
  %1224 = vmatprep.subr.mxu0 %v409
  %1225 = vmatpush1.msra.mxu0 %v408
  %1226 = vmatprep.subr.mxu0 0.0
  %1227 = vmatpush1.msra.mxu0 0.0
  %1228 = vmatprep.subr.mxu0 0.0
  %1229 = vmatpush1.msra.mxu0 0.0
  %1230 = vmatprep.subr.mxu0 0.0
  %1231 = vmatpush1.msra.mxu0 0.0
  %1232 = vmatprep.subr.mxu0 0.0
  %1233 = vmatpush1.msra.mxu0 0.0
  %1234 = vmatprep.subr.mxu0 0.0
  %1235 = vmatpush1.msra.mxu0 0.0
  %1236 = vmatprep.subr.mxu0 0.0
  %1237 = vmatpush1.msra.mxu0 0.0
  %1238 = vmatprep.subr.mxu0 0.0
  %1239 = vmatpush1.msra.mxu0 0.0
  %1240 = vmatprep.subr.mxu0 0.0
  %1241 = vmatpush1.msra.mxu0 0.0
  %1242 = vmatprep.subr.mxu0 0.0
  %1243 = vmatpush1.msra.mxu0 0.0
  %1244 = vmatprep.subr.mxu0 0.0
  %1245 = vmatpush1.msra.mxu0 0.0
  %1246 = vmatprep.subr.mxu0 0.0
  %1247 = vmatpush1.msra.mxu0 0.0
  %1248 = vmatprep.subr.mxu0 0.0
  %1249 = vmatpush1.msra.mxu0 0.0
  %1250 = vmatprep.subr.mxu0 0.0
  %1251 = vmatpush1.msra.mxu0 0.0
  %1252 = vmatprep.subr.mxu0 0.0
  %1253 = vmatpush1.msra.mxu0 0.0
  %1254 = vmatprep.subr.mxu0 0.0
  %1255 = vmatpush1.msra.mxu0 0.0
  %1256 = vmatprep.subr.mxu0 0.0
  %1257 = vmatpush1.msra.mxu0 0.0
  %1258 = vmatprep.mubr.f32.mxu0 0.0
  %1259 = vmatmul.mubr.f32.gmra.mrb[0].mxu0 %v1115
  %v1260 = vpop.f32.mrb[0].mxu0
  %v1261 = vadd.f32 0.0, %v1260
  %v1262 = vpop.f32.mrb[0].mxu0
  %v1263 = vadd.f32 0.0, %v1262
  %1264 = vdwg.mxu0
  %v1265 = vadd.f32 %v1119, %v1190
  %v1266 = vadd.f32 %v1120, %v1192
  %v1267 = vadd.f32 %v1121, %v1261
  %v1268 = vadd.f32 %v1122, %v1263
  %v1269 = vxor.u32 %v1265, 2147483648
  %v1270 = vmul.f32 %v1269, 1.442695
  %v1271 = vpow.pop %v1270
  %v1272 = vadd.f32 %v1271, 1.0
  %v1273 = vrcp.pop %v1272
  %v1274 = vmul.f32 1.0, %v1273
  %v1275 = vxor.u32 %v1266, 2147483648
  %v1276 = vmul.f32 %v1275, 1.442695
  %v1277 = vpow.pop %v1276
  %v1278 = vadd.f32 %v1277, 1.0
  %v1279 = vrcp.pop %v1278
  %v1280 = vmul.f32 1.0, %v1279
  %v1281 = vtanh.pop %v1267
  %v1282 = vxor.u32 %v1268, 2147483648
  %v1283 = vmul.f32 %v1282, 1.442695
  %v1284 = vpow.pop %v1283
  %v1285 = vadd.f32 %v1284, 1.0
  %v1286 = vrcp.pop %v1285
  %v1287 = vmul.f32 1.0, %v1286
  %v1288 = vmul.f32 %v1280, %v1113
  %v1289 = vmul.f32 %v1274, %v1281
  %v1290 = vadd.f32 %v1288, %v1289
  %v1291 = vtanh.pop %v1290
  %v1292 = vmul.f32 %v1287, %v1291
  %s1293 = scalar_lea.vmem [#allocation5], 32
  %1294 = vst [vmem:[%s1293] sm:$0xff] %v1292
  %s1295 = scalar_lea.vmem [#allocation4], 160
  %v1296 = vld [vmem:[%s1295] sm:$0xff]
  %v1297 = vld [vmem:[%s1295 + $0x8] sm:$0xff]
  %v1298 = vld [vmem:[%s1295 + $0x10] sm:$0xff]
  %v1299 = vld [vmem:[%s1295 + $0x18] sm:$0xff]
  %1300 = vmatprep.subr.mxu0 %v347
  %1301 = vmatpush1.msra.mxu0 %v346
  %1302 = vmatprep.subr.mxu0 %v351
  %1303 = vmatpush1.msra.mxu0 %v350
  %1304 = vmatprep.subr.mxu0 %v355
  %1305 = vmatpush1.msra.mxu0 %v354
  %1306 = vmatprep.subr.mxu0 %v359
  %1307 = vmatpush1.msra.mxu0 %v358
  %1308 = vmatprep.subr.mxu0 %v363
  %1309 = vmatpush1.msra.mxu0 %v362
  %1310 = vmatprep.subr.mxu0 %v367
  %1311 = vmatpush1.msra.mxu0 %v366
  %1312 = vmatprep.subr.mxu0 %v371
  %1313 = vmatpush1.msra.mxu0 %v370
  %1314 = vmatprep.subr.mxu0 %v375
  %1315 = vmatpush1.msra.mxu0 %v374
  %1316 = vmatprep.subr.mxu0 %v379
  %1317 = vmatpush1.msra.mxu0 %v378
  %1318 = vmatprep.subr.mxu0 %v383
  %1319 = vmatpush1.msra.mxu0 %v382
  %1320 = vmatprep.subr.mxu0 %v387
  %1321 = vmatpush1.msra.mxu0 %v386
  %1322 = vmatprep.subr.mxu0 %v391
  %1323 = vmatpush1.msra.mxu0 %v390
  %1324 = vmatprep.subr.mxu0 %v395
  %1325 = vmatpush1.msra.mxu0 %v394
  %1326 = vmatprep.subr.mxu0 %v399
  %1327 = vmatpush1.msra.mxu0 %v398
  %1328 = vmatprep.subr.mxu0 %v403
  %1329 = vmatpush1.msra.mxu0 %v402
  %1330 = vmatprep.subr.mxu0 %v407
  %1331 = vmatpush1.msra.mxu0 %v406
  %1332 = vmatprep.subr.mxu0 0.0
  %1333 = vmatpush1.msra.mxu0 0.0
  %1334 = vmatprep.subr.mxu0 0.0
  %1335 = vmatpush1.msra.mxu0 0.0
  %1336 = vmatprep.subr.mxu0 0.0
  %1337 = vmatpush1.msra.mxu0 0.0
  %1338 = vmatprep.subr.mxu0 0.0
  %1339 = vmatpush1.msra.mxu0 0.0
  %1340 = vmatprep.subr.mxu0 0.0
  %1341 = vmatpush1.msra.mxu0 0.0
  %1342 = vmatprep.subr.mxu0 0.0
  %1343 = vmatpush1.msra.mxu0 0.0
  %1344 = vmatprep.subr.mxu0 0.0
  %1345 = vmatpush1.msra.mxu0 0.0
  %1346 = vmatprep.subr.mxu0 0.0
  %1347 = vmatpush1.msra.mxu0 0.0
  %1348 = vmatprep.subr.mxu0 0.0
  %1349 = vmatpush1.msra.mxu0 0.0
  %1350 = vmatprep.subr.mxu0 0.0
  %1351 = vmatpush1.msra.mxu0 0.0
  %1352 = vmatprep.subr.mxu0 0.0
  %1353 = vmatpush1.msra.mxu0 0.0
  %1354 = vmatprep.subr.mxu0 0.0
  %1355 = vmatpush1.msra.mxu0 0.0
  %1356 = vmatprep.subr.mxu0 0.0
  %1357 = vmatpush1.msra.mxu0 0.0
  %1358 = vmatprep.subr.mxu0 0.0
  %1359 = vmatpush1.msra.mxu0 0.0
  %1360 = vmatprep.subr.mxu0 0.0
  %1361 = vmatpush1.msra.mxu0 0.0
  %1362 = vmatprep.subr.mxu0 0.0
  %1363 = vmatpush1.msra.mxu0 0.0
  %1364 = vmatprep.mubr.f32.mxu0 0.0
  %1365 = vmatmul.mubr.f32.gmra.mrb[0].mxu0 %v1292
  %v1366 = vpop.f32.mrb[0].mxu0
  %v1367 = vadd.f32 0.0, %v1366
  %v1368 = vpop.f32.mrb[0].mxu0
  %v1369 = vadd.f32 0.0, %v1368
  %1370 = vdwg.mxu0
  %1371 = vmatprep.subr.mxu0 %v349
  %1372 = vmatpush1.msra.mxu0 %v348
  %1373 = vmatprep.subr.mxu0 %v353
  %1374 = vmatpush1.msra.mxu0 %v352
  %1375 = vmatprep.subr.mxu0 %v357
  %1376 = vmatpush1.msra.mxu0 %v356
  %1377 = vmatprep.subr.mxu0 %v361
  %1378 = vmatpush1.msra.mxu0 %v360
  %1379 = vmatprep.subr.mxu0 %v365
  %1380 = vmatpush1.msra.mxu0 %v364
  %1381 = vmatprep.subr.mxu0 %v369
  %1382 = vmatpush1.msra.mxu0 %v368
  %1383 = vmatprep.subr.mxu0 %v373
  %1384 = vmatpush1.msra.mxu0 %v372
  %1385 = vmatprep.subr.mxu0 %v377
  %1386 = vmatpush1.msra.mxu0 %v376
  %1387 = vmatprep.subr.mxu0 %v381
  %1388 = vmatpush1.msra.mxu0 %v380
  %1389 = vmatprep.subr.mxu0 %v385
  %1390 = vmatpush1.msra.mxu0 %v384
  %1391 = vmatprep.subr.mxu0 %v389
  %1392 = vmatpush1.msra.mxu0 %v388
  %1393 = vmatprep.subr.mxu0 %v393
  %1394 = vmatpush1.msra.mxu0 %v392
  %1395 = vmatprep.subr.mxu0 %v397
  %1396 = vmatpush1.msra.mxu0 %v396
  %1397 = vmatprep.subr.mxu0 %v401
  %1398 = vmatpush1.msra.mxu0 %v400
  %1399 = vmatprep.subr.mxu0 %v405
  %1400 = vmatpush1.msra.mxu0 %v404
  %1401 = vmatprep.subr.mxu0 %v409
  %1402 = vmatpush1.msra.mxu0 %v408
  %1403 = vmatprep.subr.mxu0 0.0
  %1404 = vmatpush1.msra.mxu0 0.0
  %1405 = vmatprep.subr.mxu0 0.0
  %1406 = vmatpush1.msra.mxu0 0.0
  %1407 = vmatprep.subr.mxu0 0.0
  %1408 = vmatpush1.msra.mxu0 0.0
  %1409 = vmatprep.subr.mxu0 0.0
  %1410 = vmatpush1.msra.mxu0 0.0
  %1411 = vmatprep.subr.mxu0 0.0
  %1412 = vmatpush1.msra.mxu0 0.0
  %1413 = vmatprep.subr.mxu0 0.0
  %1414 = vmatpush1.msra.mxu0 0.0
  %1415 = vmatprep.subr.mxu0 0.0
  %1416 = vmatpush1.msra.mxu0 0.0
  %1417 = vmatprep.subr.mxu0 0.0
  %1418 = vmatpush1.msra.mxu0 0.0
  %1419 = vmatprep.subr.mxu0 0.0
  %1420 = vmatpush1.msra.mxu0 0.0
  %1421 = vmatprep.subr.mxu0 0.0
  %1422 = vmatpush1.msra.mxu0 0.0
  %1423 = vmatprep.subr.mxu0 0.0
  %1424 = vmatpush1.msra.mxu0 0.0
  %1425 = vmatprep.subr.mxu0 0.0
  %1426 = vmatpush1.msra.mxu0 0.0
  %1427 = vmatprep.subr.mxu0 0.0
  %1428 = vmatpush1.msra.mxu0 0.0
  %1429 = vmatprep.subr.mxu0 0.0
  %1430 = vmatpush1.msra.mxu0 0.0
  %1431 = vmatprep.subr.mxu0 0.0
  %1432 = vmatpush1.msra.mxu0 0.0
  %1433 = vmatprep.subr.mxu0 0.0
  %1434 = vmatpush1.msra.mxu0 0.0
  %1435 = vmatprep.mubr.f32.mxu0 0.0
  %1436 = vmatmul.mubr.f32.gmra.mrb[0].mxu0 %v1292
  %v1437 = vpop.f32.mrb[0].mxu0
  %v1438 = vadd.f32 0.0, %v1437
  %v1439 = vpop.f32.mrb[0].mxu0
  %v1440 = vadd.f32 0.0, %v1439
  %1441 = vdwg.mxu0
  %v1442 = vadd.f32 %v1296, %v1367
  %v1443 = vadd.f32 %v1297, %v1369
  %v1444 = vadd.f32 %v1298, %v1438
  %v1445 = vadd.f32 %v1299, %v1440
  %v1446 = vxor.u32 %v1442, 2147483648
  %v1447 = vmul.f32 %v1446, 1.442695
  %v1448 = vpow.pop %v1447
  %v1449 = vadd.f32 %v1448, 1.0
  %v1450 = vrcp.pop %v1449
  %v1451 = vmul.f32 1.0, %v1450
  %v1452 = vxor.u32 %v1443, 2147483648
  %v1453 = vmul.f32 %v1452, 1.442695
  %v1454 = vpow.pop %v1453
  %v1455 = vadd.f32 %v1454, 1.0
  %v1456 = vrcp.pop %v1455
  %v1457 = vmul.f32 1.0, %v1456
  %v1458 = vtanh.pop %v1444
  %v1459 = vxor.u32 %v1445, 2147483648
  %v1460 = vmul.f32 %v1459, 1.442695
  %v1461 = vpow.pop %v1460
  %v1462 = vadd.f32 %v1461, 1.0
  %v1463 = vrcp.pop %v1462
  %v1464 = vmul.f32 1.0, %v1463
  %v1465 = vmul.f32 %v1457, %v1290
  %v1466 = vmul.f32 %v1451, %v1458
  %v1467 = vadd.f32 %v1465, %v1466
  %v1468 = vtanh.pop %v1467
  %v1469 = vmul.f32 %v1464, %v1468
  %s1470 = scalar_lea.vmem [#allocation5], 40
  %1471 = vst [vmem:[%s1470] sm:$0xff] %v1469
  %s1472 = scalar_lea.vmem [#allocation4], 192
  %v1473 = vld [vmem:[%s1472] sm:$0xff]
  %v1474 = vld [vmem:[%s1472 + $0x8] sm:$0xff]
  %v1475 = vld [vmem:[%s1472 + $0x10] sm:$0xff]
  %v1476 = vld [vmem:[%s1472 + $0x18] sm:$0xff]
  %1477 = vmatprep.subr.mxu0 %v347
  %1478 = vmatpush1.msra.mxu0 %v346
  %1479 = vmatprep.subr.mxu0 %v351
  %1480 = vmatpush1.msra.mxu0 %v350
  %1481 = vmatprep.subr.mxu0 %v355
  %1482 = vmatpush1.msra.mxu0 %v354
  %1483 = vmatprep.subr.mxu0 %v359
  %1484 = vmatpush1.msra.mxu0 %v358
  %1485 = vmatprep.subr.mxu0 %v363
  %1486 = vmatpush1.msra.mxu0 %v362
  %1487 = vmatprep.subr.mxu0 %v367
  %1488 = vmatpush1.msra.mxu0 %v366
  %1489 = vmatprep.subr.mxu0 %v371
  %1490 = vmatpush1.msra.mxu0 %v370
  %1491 = vmatprep.subr.mxu0 %v375
  %1492 = vmatpush1.msra.mxu0 %v374
  %1493 = vmatprep.subr.mxu0 %v379
  %1494 = vmatpush1.msra.mxu0 %v378
  %1495 = vmatprep.subr.mxu0 %v383
  %1496 = vmatpush1.msra.mxu0 %v382
  %1497 = vmatprep.subr.mxu0 %v387
  %1498 = vmatpush1.msra.mxu0 %v386
  %1499 = vmatprep.subr.mxu0 %v391
  %1500 = vmatpush1.msra.mxu0 %v390
  %1501 = vmatprep.subr.mxu0 %v395
  %1502 = vmatpush1.msra.mxu0 %v394
  %1503 = vmatprep.subr.mxu0 %v399
  %1504 = vmatpush1.msra.mxu0 %v398
  %1505 = vmatprep.subr.mxu0 %v403
  %1506 = vmatpush1.msra.mxu0 %v402
  %1507 = vmatprep.subr.mxu0 %v407
  %1508 = vmatpush1.msra.mxu0 %v406
  %1509 = vmatprep.subr.mxu0 0.0
  %1510 = vmatpush1.msra.mxu0 0.0
  %1511 = vmatprep.subr.mxu0 0.0
  %1512 = vmatpush1.msra.mxu0 0.0
  %1513 = vmatprep.subr.mxu0 0.0
  %1514 = vmatpush1.msra.mxu0 0.0
  %1515 = vmatprep.subr.mxu0 0.0
  %1516 = vmatpush1.msra.mxu0 0.0
  %1517 = vmatprep.subr.mxu0 0.0
  %1518 = vmatpush1.msra.mxu0 0.0
  %1519 = vmatprep.subr.mxu0 0.0
  %1520 = vmatpush1.msra.mxu0 0.0
  %1521 = vmatprep.subr.mxu0 0.0
  %1522 = vmatpush1.msra.mxu0 0.0
  %1523 = vmatprep.subr.mxu0 0.0
  %1524 = vmatpush1.msra.mxu0 0.0
  %1525 = vmatprep.subr.mxu0 0.0
  %1526 = vmatpush1.msra.mxu0 0.0
  %1527 = vmatprep.subr.mxu0 0.0
  %1528 = vmatpush1.msra.mxu0 0.0
  %1529 = vmatprep.subr.mxu0 0.0
  %1530 = vmatpush1.msra.mxu0 0.0
  %1531 = vmatprep.subr.mxu0 0.0
  %1532 = vmatpush1.msra.mxu0 0.0
  %1533 = vmatprep.subr.mxu0 0.0
  %1534 = vmatpush1.msra.mxu0 0.0
  %1535 = vmatprep.subr.mxu0 0.0
  %1536 = vmatpush1.msra.mxu0 0.0
  %1537 = vmatprep.subr.mxu0 0.0
  %1538 = vmatpush1.msra.mxu0 0.0
  %1539 = vmatprep.subr.mxu0 0.0
  %1540 = vmatpush1.msra.mxu0 0.0
  %1541 = vmatprep.mubr.f32.mxu0 0.0
  %1542 = vmatmul.mubr.f32.gmra.mrb[0].mxu0 %v1469
  %v1543 = vpop.f32.mrb[0].mxu0
  %v1544 = vadd.f32 0.0, %v1543
  %v1545 = vpop.f32.mrb[0].mxu0
  %v1546 = vadd.f32 0.0, %v1545
  %1547 = vdwg.mxu0
  %1548 = vmatprep.subr.mxu0 %v349
  %1549 = vmatpush1.msra.mxu0 %v348
  %1550 = vmatprep.subr.mxu0 %v353
  %1551 = vmatpush1.msra.mxu0 %v352
  %1552 = vmatprep.subr.mxu0 %v357
  %1553 = vmatpush1.msra.mxu0 %v356
  %1554 = vmatprep.subr.mxu0 %v361
  %1555 = vmatpush1.msra.mxu0 %v360
  %1556 = vmatprep.subr.mxu0 %v365
  %1557 = vmatpush1.msra.mxu0 %v364
  %1558 = vmatprep.subr.mxu0 %v369
  %1559 = vmatpush1.msra.mxu0 %v368
  %1560 = vmatprep.subr.mxu0 %v373
  %1561 = vmatpush1.msra.mxu0 %v372
  %1562 = vmatprep.subr.mxu0 %v377
  %1563 = vmatpush1.msra.mxu0 %v376
  %1564 = vmatprep.subr.mxu0 %v381
  %1565 = vmatpush1.msra.mxu0 %v380
  %1566 = vmatprep.subr.mxu0 %v385
  %1567 = vmatpush1.msra.mxu0 %v384
  %1568 = vmatprep.subr.mxu0 %v389
  %1569 = vmatpush1.msra.mxu0 %v388
  %1570 = vmatprep.subr.mxu0 %v393
  %1571 = vmatpush1.msra.mxu0 %v392
  %1572 = vmatprep.subr.mxu0 %v397
  %1573 = vmatpush1.msra.mxu0 %v396
  %1574 = vmatprep.subr.mxu0 %v401
  %1575 = vmatpush1.msra.mxu0 %v400
  %1576 = vmatprep.subr.mxu0 %v405
  %1577 = vmatpush1.msra.mxu0 %v404
  %1578 = vmatprep.subr.mxu0 %v409
  %1579 = vmatpush1.msra.mxu0 %v408
  %1580 = vmatprep.subr.mxu0 0.0
  %1581 = vmatpush1.msra.mxu0 0.0
  %1582 = vmatprep.subr.mxu0 0.0
  %1583 = vmatpush1.msra.mxu0 0.0
  %1584 = vmatprep.subr.mxu0 0.0
  %1585 = vmatpush1.msra.mxu0 0.0
  %1586 = vmatprep.subr.mxu0 0.0
  %1587 = vmatpush1.msra.mxu0 0.0
  %1588 = vmatprep.subr.mxu0 0.0
  %1589 = vmatpush1.msra.mxu0 0.0
  %1590 = vmatprep.subr.mxu0 0.0
  %1591 = vmatpush1.msra.mxu0 0.0
  %1592 = vmatprep.subr.mxu0 0.0
  %1593 = vmatpush1.msra.mxu0 0.0
  %1594 = vmatprep.subr.mxu0 0.0
  %1595 = vmatpush1.msra.mxu0 0.0
  %1596 = vmatprep.subr.mxu0 0.0
  %1597 = vmatpush1.msra.mxu0 0.0
  %1598 = vmatprep.subr.mxu0 0.0
  %1599 = vmatpush1.msra.mxu0 0.0
  %1600 = vmatprep.subr.mxu0 0.0
  %1601 = vmatpush1.msra.mxu0 0.0
  %1602 = vmatprep.subr.mxu0 0.0
  %1603 = vmatpush1.msra.mxu0 0.0
  %1604 = vmatprep.subr.mxu0 0.0
  %1605 = vmatpush1.msra.mxu0 0.0
  %1606 = vmatprep.subr.mxu0 0.0
  %1607 = vmatpush1.msra.mxu0 0.0
  %1608 = vmatprep.subr.mxu0 0.0
  %1609 = vmatpush1.msra.mxu0 0.0
  %1610 = vmatprep.subr.mxu0 0.0
  %1611 = vmatpush1.msra.mxu0 0.0
  %1612 = vmatprep.mubr.f32.mxu0 0.0
  %1613 = vmatmul.mubr.f32.gmra.mrb[0].mxu0 %v1469
  %v1614 = vpop.f32.mrb[0].mxu0
  %v1615 = vadd.f32 0.0, %v1614
  %v1616 = vpop.f32.mrb[0].mxu0
  %v1617 = vadd.f32 0.0, %v1616
  %1618 = vdwg.mxu0
  %v1619 = vadd.f32 %v1473, %v1544
  %v1620 = vadd.f32 %v1474, %v1546
  %v1621 = vadd.f32 %v1475, %v1615
  %v1622 = vadd.f32 %v1476, %v1617
  %v1623 = vxor.u32 %v1619, 2147483648
  %v1624 = vmul.f32 %v1623, 1.442695
  %v1625 = vpow.pop %v1624
  %v1626 = vadd.f32 %v1625, 1.0
  %v1627 = vrcp.pop %v1626
  %v1628 = vmul.f32 1.0, %v1627
  %v1629 = vxor.u32 %v1620, 2147483648
  %v1630 = vmul.f32 %v1629, 1.442695
  %v1631 = vpow.pop %v1630
  %v1632 = vadd.f32 %v1631, 1.0
  %v1633 = vrcp.pop %v1632
  %v1634 = vmul.f32 1.0, %v1633
  %v1635 = vtanh.pop %v1621
  %v1636 = vxor.u32 %v1622, 2147483648
  %v1637 = vmul.f32 %v1636, 1.442695
  %v1638 = vpow.pop %v1637
  %v1639 = vadd.f32 %v1638, 1.0
  %v1640 = vrcp.pop %v1639
  %v1641 = vmul.f32 1.0, %v1640
  %v1642 = vmul.f32 %v1634, %v1467
  %v1643 = vmul.f32 %v1628, %v1635
  %v1644 = vadd.f32 %v1642, %v1643
  %v1645 = vtanh.pop %v1644
  %v1646 = vmul.f32 %v1641, %v1645
  %s1647 = scalar_lea.vmem [#allocation5], 48
  %1648 = vst [vmem:[%s1647] sm:$0xff] %v1646
  %s1649 = scalar_lea.vmem [#allocation4], 224
  %v1650 = vld [vmem:[%s1649] sm:$0xff]
  %v1651 = vld [vmem:[%s1649 + $0x8] sm:$0xff]
  %v1652 = vld [vmem:[%s1649 + $0x10] sm:$0xff]
  %v1653 = vld [vmem:[%s1649 + $0x18] sm:$0xff]
  %1654 = vmatprep.subr.mxu0 %v347
  %1655 = vmatpush1.msra.mxu0 %v346
  %1656 = vmatprep.subr.mxu0 %v351
  %1657 = vmatpush1.msra.mxu0 %v350
  %1658 = vmatprep.subr.mxu0 %v355
  %1659 = vmatpush1.msra.mxu0 %v354
  %1660 = vmatprep.subr.mxu0 %v359
  %1661 = vmatpush1.msra.mxu0 %v358
  %1662 = vmatprep.subr.mxu0 %v363
  %1663 = vmatpush1.msra.mxu0 %v362
  %1664 = vmatprep.subr.mxu0 %v367
  %1665 = vmatpush1.msra.mxu0 %v366
  %1666 = vmatprep.subr.mxu0 %v371
  %1667 = vmatpush1.msra.mxu0 %v370
  %1668 = vmatprep.subr.mxu0 %v375
  %1669 = vmatpush1.msra.mxu0 %v374
  %1670 = vmatprep.subr.mxu0 %v379
  %1671 = vmatpush1.msra.mxu0 %v378
  %1672 = vmatprep.subr.mxu0 %v383
  %1673 = vmatpush1.msra.mxu0 %v382
  %1674 = vmatprep.subr.mxu0 %v387
  %1675 = vmatpush1.msra.mxu0 %v386
  %1676 = vmatprep.subr.mxu0 %v391
  %1677 = vmatpush1.msra.mxu0 %v390
  %1678 = vmatprep.subr.mxu0 %v395
  %1679 = vmatpush1.msra.mxu0 %v394
  %1680 = vmatprep.subr.mxu0 %v399
  %1681 = vmatpush1.msra.mxu0 %v398
  %1682 = vmatprep.subr.mxu0 %v403
  %1683 = vmatpush1.msra.mxu0 %v402
  %1684 = vmatprep.subr.mxu0 %v407
  %1685 = vmatpush1.msra.mxu0 %v406
  %1686 = vmatprep.subr.mxu0 0.0
  %1687 = vmatpush1.msra.mxu0 0.0
  %1688 = vmatprep.subr.mxu0 0.0
  %1689 = vmatpush1.msra.mxu0 0.0
  %1690 = vmatprep.subr.mxu0 0.0
  %1691 = vmatpush1.msra.mxu0 0.0
  %1692 = vmatprep.subr.mxu0 0.0
  %1693 = vmatpush1.msra.mxu0 0.0
  %1694 = vmatprep.subr.mxu0 0.0
  %1695 = vmatpush1.msra.mxu0 0.0
  %1696 = vmatprep.subr.mxu0 0.0
  %1697 = vmatpush1.msra.mxu0 0.0
  %1698 = vmatprep.subr.mxu0 0.0
  %1699 = vmatpush1.msra.mxu0 0.0
  %1700 = vmatprep.subr.mxu0 0.0
  %1701 = vmatpush1.msra.mxu0 0.0
  %1702 = vmatprep.subr.mxu0 0.0
  %1703 = vmatpush1.msra.mxu0 0.0
  %1704 = vmatprep.subr.mxu0 0.0
  %1705 = vmatpush1.msra.mxu0 0.0
  %1706 = vmatprep.subr.mxu0 0.0
  %1707 = vmatpush1.msra.mxu0 0.0
  %1708 = vmatprep.subr.mxu0 0.0
  %1709 = vmatpush1.msra.mxu0 0.0
  %1710 = vmatprep.subr.mxu0 0.0
  %1711 = vmatpush1.msra.mxu0 0.0
  %1712 = vmatprep.subr.mxu0 0.0
  %1713 = vmatpush1.msra.mxu0 0.0
  %1714 = vmatprep.subr.mxu0 0.0
  %1715 = vmatpush1.msra.mxu0 0.0
  %1716 = vmatprep.subr.mxu0 0.0
  %1717 = vmatpush1.msra.mxu0 0.0
  %1718 = vmatprep.mubr.f32.mxu0 0.0
  %1719 = vmatmul.mubr.f32.gmra.mrb[0].mxu0 %v1646
  %v1720 = vpop.f32.mrb[0].mxu0
  %v1721 = vadd.f32 0.0, %v1720
  %v1722 = vpop.f32.mrb[0].mxu0
  %v1723 = vadd.f32 0.0, %v1722
  %1724 = vdwg.mxu0
  %1725 = vmatprep.subr.mxu0 %v349
  %1726 = vmatpush1.msra.mxu0 %v348
  %1727 = vmatprep.subr.mxu0 %v353
  %1728 = vmatpush1.msra.mxu0 %v352
  %1729 = vmatprep.subr.mxu0 %v357
  %1730 = vmatpush1.msra.mxu0 %v356
  %1731 = vmatprep.subr.mxu0 %v361
  %1732 = vmatpush1.msra.mxu0 %v360
  %1733 = vmatprep.subr.mxu0 %v365
  %1734 = vmatpush1.msra.mxu0 %v364
  %1735 = vmatprep.subr.mxu0 %v369
  %1736 = vmatpush1.msra.mxu0 %v368
  %1737 = vmatprep.subr.mxu0 %v373
  %1738 = vmatpush1.msra.mxu0 %v372
  %1739 = vmatprep.subr.mxu0 %v377
  %1740 = vmatpush1.msra.mxu0 %v376
  %1741 = vmatprep.subr.mxu0 %v381
  %1742 = vmatpush1.msra.mxu0 %v380
  %1743 = vmatprep.subr.mxu0 %v385
  %1744 = vmatpush1.msra.mxu0 %v384
  %1745 = vmatprep.subr.mxu0 %v389
  %1746 = vmatpush1.msra.mxu0 %v388
  %1747 = vmatprep.subr.mxu0 %v393
  %1748 = vmatpush1.msra.mxu0 %v392
  %1749 = vmatprep.subr.mxu0 %v397
  %1750 = vmatpush1.msra.mxu0 %v396
  %1751 = vmatprep.subr.mxu0 %v401
  %1752 = vmatpush1.msra.mxu0 %v400
  %1753 = vmatprep.subr.mxu0 %v405
  %1754 = vmatpush1.msra.mxu0 %v404
  %1755 = vmatprep.subr.mxu0 %v409
  %1756 = vmatpush1.msra.mxu0 %v408
  %1757 = vmatprep.subr.mxu0 0.0
  %1758 = vmatpush1.msra.mxu0 0.0
  %1759 = vmatprep.subr.mxu0 0.0
  %1760 = vmatpush1.msra.mxu0 0.0
  %1761 = vmatprep.subr.mxu0 0.0
  %1762 = vmatpush1.msra.mxu0 0.0
  %1763 = vmatprep.subr.mxu0 0.0
  %1764 = vmatpush1.msra.mxu0 0.0
  %1765 = vmatprep.subr.mxu0 0.0
  %1766 = vmatpush1.msra.mxu0 0.0
  %1767 = vmatprep.subr.mxu0 0.0
  %1768 = vmatpush1.msra.mxu0 0.0
  %1769 = vmatprep.subr.mxu0 0.0
  %1770 = vmatpush1.msra.mxu0 0.0
  %1771 = vmatprep.subr.mxu0 0.0
  %1772 = vmatpush1.msra.mxu0 0.0
  %1773 = vmatprep.subr.mxu0 0.0
  %1774 = vmatpush1.msra.mxu0 0.0
  %1775 = vmatprep.subr.mxu0 0.0
  %1776 = vmatpush1.msra.mxu0 0.0
  %1777 = vmatprep.subr.mxu0 0.0
  %1778 = vmatpush1.msra.mxu0 0.0
  %1779 = vmatprep.subr.mxu0 0.0
  %1780 = vmatpush1.msra.mxu0 0.0
  %1781 = vmatprep.subr.mxu0 0.0
  %1782 = vmatpush1.msra.mxu0 0.0
  %1783 = vmatprep.subr.mxu0 0.0
  %1784 = vmatpush1.msra.mxu0 0.0
  %1785 = vmatprep.subr.mxu0 0.0
  %1786 = vmatpush1.msra.mxu0 0.0
  %1787 = vmatprep.subr.mxu0 0.0
  %1788 = vmatpush1.msra.mxu0 0.0
  %1789 = vmatprep.mubr.f32.mxu0 0.0
  %1790 = vmatmul.mubr.f32.gmra.mrb[0].mxu0 %v1646
  %v1791 = vpop.f32.mrb[0].mxu0
  %v1792 = vadd.f32 0.0, %v1791
  %v1793 = vpop.f32.mrb[0].mxu0
  %v1794 = vadd.f32 0.0, %v1793
  %1795 = vdwg.mxu0
  %v1796 = vadd.f32 %v1650, %v1721
  %v1797 = vadd.f32 %v1651, %v1723
  %v1798 = vadd.f32 %v1652, %v1792
  %v1799 = vadd.f32 %v1653, %v1794
  %v1800 = vxor.u32 %v1796, 2147483648
  %v1801 = vmul.f32 %v1800, 1.442695
  %v1802 = vpow.pop %v1801
  %v1803 = vadd.f32 %v1802, 1.0
  %v1804 = vrcp.pop %v1803
  %v1805 = vmul.f32 1.0, %v1804
  %v1806 = vxor.u32 %v1797, 2147483648
  %v1807 = vmul.f32 %v1806, 1.442695
  %v1808 = vpow.pop %v1807
  %v1809 = vadd.f32 %v1808, 1.0
  %v1810 = vrcp.pop %v1809
  %v1811 = vmul.f32 1.0, %v1810
  %v1812 = vtanh.pop %v1798
  %v1813 = vxor.u32 %v1799, 2147483648
  %v1814 = vmul.f32 %v1813, 1.442695
  %v1815 = vpow.pop %v1814
  %v1816 = vadd.f32 %v1815, 1.0
  %v1817 = vrcp.pop %v1816
  %v1818 = vmul.f32 1.0, %v1817
  %v1819 = vmul.f32 %v1811, %v1644
  %v1820 = vmul.f32 %v1805, %v1812
  %v1821 = vadd.f32 %v1819, %v1820
  %v1822 = vtanh.pop %v1821
  %v1823 = vmul.f32 %v1818, %v1822
  %s1824 = scalar_lea.vmem [#allocation5], 56
  %1825 = vst [vmem:[%s1824] sm:$0xff] %v1823
  %1826 = vst [vmem:[#allocation2] sm:$0xff] %v1823
  %1827 = vst [vmem:[#allocation3] sm:$0xff] %v1821
  %v1828 = vld [vmem:[#allocation5] sm:$0xff]
  %v1829 = vld [vmem:[#allocation5 + $0x8] sm:$0xff]
  %v1830 = vld [vmem:[#allocation5 + $0x10] sm:$0xff]
  %v1831 = vld [vmem:[#allocation5 + $0x18] sm:$0xff]
  %v1832 = vld [vmem:[#allocation5 + $0x20] sm:$0xff]
  %v1833 = vld [vmem:[#allocation5 + $0x28] sm:$0xff]
  %v1834 = vld [vmem:[#allocation5 + $0x30] sm:$0xff]
  %v1835 = vld [vmem:[#allocation5 + $0x38] sm:$0xff]
  %v1836 = vld [vmem:[%s4] sm:$0xff]
  %v1837 = vld [vmem:[%s4 + $0x8] sm:$0xff]
  %v1838 = vld [vmem:[%s4 + $0x10] sm:$0xff]
  %v1839 = vld [vmem:[%s4 + $0x18] sm:$0xff]
  %v1840 = vld [vmem:[%s4 + $0x20] sm:$0xff]
  %v1841 = vld [vmem:[%s4 + $0x28] sm:$0xff]
  %v1842 = vld [vmem:[%s4 + $0x30] sm:$0xff]
  %v1843 = vld [vmem:[%s4 + $0x38] sm:$0xff]
  %v1844 = vld [vmem:[%s4 + $0x40] sm:$0xff]
  %v1845 = vld [vmem:[%s4 + $0x48] sm:$0xff]
  %v1846 = vld [vmem:[%s4 + $0x50] sm:$0xff]
  %v1847 = vld [vmem:[%s4 + $0x58] sm:$0xff]
  %v1848 = vld [vmem:[%s4 + $0x60] sm:$0xff]
  %v1849 = vld [vmem:[%s4 + $0x68] sm:$0xff]
  %v1850 = vld [vmem:[%s4 + $0x70] sm:$0xff]
  %v1851 = vld [vmem:[%s4 + $0x78] sm:$0xff]
  %v1852 = vld [vmem:[%s5] sm:$0x1]
  %v1854 = vlaneseq
  %v1855 = vshrl.u32 %v1854, 7
  %v1856 = vsub.s32 0, %v1855
  %v1857 = vrot.slane %v1852, %v1856
  %1859 = vmatprep.subr.mxu0 0.0
  %1860 = vmatpush1.msra.mxu0 %v1836
  %1861 = vmatprep.subr.mxu0 0.0
  %1862 = vmatpush1.msra.mxu0 %v1837
  %1863 = vmatprep.subr.mxu0 0.0
  %1864 = vmatpush1.msra.mxu0 %v1838
  %1865 = vmatprep.subr.mxu0 0.0
  %1866 = vmatpush1.msra.mxu0 %v1839
  %1867 = vmatprep.subr.mxu0 0.0
  %1868 = vmatpush1.msra.mxu0 %v1840
  %1869 = vmatprep.subr.mxu0 0.0
  %1870 = vmatpush1.msra.mxu0 %v1841
  %1871 = vmatprep.subr.mxu0 0.0
  %1872 = vmatpush1.msra.mxu0 %v1842
  %1873 = vmatprep.subr.mxu0 0.0
  %1874 = vmatpush1.msra.mxu0 %v1843
  %1875 = vmatprep.subr.mxu0 0.0
  %1876 = vmatpush1.msra.mxu0 %v1844
  %1877 = vmatprep.subr.mxu0 0.0
  %1878 = vmatpush1.msra.mxu0 %v1845
  %1879 = vmatprep.subr.mxu0 0.0
  %1880 = vmatpush1.msra.mxu0 %v1846
  %1881 = vmatprep.subr.mxu0 0.0
  %1882 = vmatpush1.msra.mxu0 %v1847
  %1883 = vmatprep.subr.mxu0 0.0
  %1884 = vmatpush1.msra.mxu0 %v1848
  %1885 = vmatprep.subr.mxu0 0.0
  %1886 = vmatpush1.msra.mxu0 %v1849
  %1887 = vmatprep.subr.mxu0 0.0
  %1888 = vmatpush1.msra.mxu0 %v1850
  %1889 = vmatprep.subr.mxu0 0.0
  %1890 = vmatpush1.msra.mxu0 %v1851
  %1891 = vmatprep.subr.mxu0 0.0
  %1892 = vmatpush1.msra.mxu0 0.0
  %1893 = vmatprep.subr.mxu0 0.0
  %1894 = vmatpush1.msra.mxu0 0.0
  %1895 = vmatprep.subr.mxu0 0.0
  %1896 = vmatpush1.msra.mxu0 0.0
  %1897 = vmatprep.subr.mxu0 0.0
  %1898 = vmatpush1.msra.mxu0 0.0
  %1899 = vmatprep.subr.mxu0 0.0
  %1900 = vmatpush1.msra.mxu0 0.0
  %1901 = vmatprep.subr.mxu0 0.0
  %1902 = vmatpush1.msra.mxu0 0.0
  %1903 = vmatprep.subr.mxu0 0.0
  %1904 = vmatpush1.msra.mxu0 0.0
  %1905 = vmatprep.subr.mxu0 0.0
  %1906 = vmatpush1.msra.mxu0 0.0
  %1907 = vmatprep.subr.mxu0 0.0
  %1908 = vmatpush1.msra.mxu0 0.0
  %1909 = vmatprep.subr.mxu0 0.0
  %1910 = vmatpush1.msra.mxu0 0.0
  %1911 = vmatprep.subr.mxu0 0.0
  %1912 = vmatpush1.msra.mxu0 0.0
  %1913 = vmatprep.subr.mxu0 0.0
  %1914 = vmatpush1.msra.mxu0 0.0
  %1915 = vmatprep.subr.mxu0 0.0
  %1916 = vmatpush1.msra.mxu0 0.0
  %1917 = vmatprep.subr.mxu0 0.0
  %1918 = vmatpush1.msra.mxu0 0.0
  %1919 = vmatprep.subr.mxu0 0.0
  %1920 = vmatpush1.msra.mxu0 0.0
  %1921 = vmatprep.subr.mxu0 0.0
  %1922 = vmatpush1.msra.mxu0 0.0
  %1923 = vmatprep.mubr.f32.mxu0 0.0
  %1924 = vmatmul.mubr.f32.gmra.mrb[0].mxu0 %v1828
  %v1925 = vpop.f32.mrb[0].mxu0
  %v1926 = vadd.f32 %v1857, %v1925
  %v1927 = vpop.f32.mrb[0].mxu0
  %1928 = vmatprep.mubr.f32.mxu0 0.0
  %1929 = vmatmul.mubr.f32.gmra.mrb[0].mxu0 %v1829
  %v1930 = vpop.f32.mrb[0].mxu0
  %v1931 = vadd.f32 %v1857, %v1930
  %v1932 = vpop.f32.mrb[0].mxu0
  %1933 = vmatprep.mubr.f32.mxu0 0.0
  %1934 = vmatmul.mubr.f32.gmra.mrb[0].mxu0 %v1830
  %v1935 = vpop.f32.mrb[0].mxu0
  %v1936 = vadd.f32 %v1857, %v1935
  %v1937 = vpop.f32.mrb[0].mxu0
  %1938 = vmatprep.mubr.f32.mxu0 0.0
  %1939 = vmatmul.mubr.f32.gmra.mrb[0].mxu0 %v1831
  %v1940 = vpop.f32.mrb[0].mxu0
  %v1941 = vadd.f32 %v1857, %v1940
  %v1942 = vpop.f32.mrb[0].mxu0
  %1943 = vmatprep.mubr.f32.mxu0 0.0
  %1944 = vmatmul.mubr.f32.gmra.mrb[0].mxu0 %v1832
  %v1945 = vpop.f32.mrb[0].mxu0
  %v1946 = vadd.f32 %v1857, %v1945
  %v1947 = vpop.f32.mrb[0].mxu0
  %1948 = vmatprep.mubr.f32.mxu0 0.0
  %1949 = vmatmul.mubr.f32.gmra.mrb[0].mxu0 %v1833
  %v1950 = vpop.f32.mrb[0].mxu0
  %v1951 = vadd.f32 %v1857, %v1950
  %v1952 = vpop.f32.mrb[0].mxu0
  %1953 = vmatprep.mubr.f32.mxu0 0.0
  %1954 = vmatmul.mubr.f32.gmra.mrb[0].mxu0 %v1834
  %v1955 = vpop.f32.mrb[0].mxu0
  %v1956 = vadd.f32 %v1857, %v1955
  %v1957 = vpop.f32.mrb[0].mxu0
  %1958 = vmatprep.mubr.f32.mxu0 0.0
  %1959 = vmatmul.mubr.f32.gmra.mrb[0].mxu0 %v1835
  %v1960 = vpop.f32.mrb[0].mxu0
  %v1961 = vadd.f32 %v1857, %v1960
  %v1962 = vpop.f32.mrb[0].mxu0
  %1963 = vdwg.mxu0
  %1964 = vst [vmem:[%s6] sm:$0xff] %v1926
  %1965 = vst [vmem:[%s6 + $0x8] sm:$0xff] %v1931
  %1966 = vst [vmem:[%s6 + $0x10] sm:$0xff] %v1936
  %1967 = vst [vmem:[%s6 + $0x18] sm:$0xff] %v1941
  %1968 = vst [vmem:[%s6 + $0x20] sm:$0xff] %v1946
  %1969 = vst [vmem:[%s6 + $0x28] sm:$0xff] %v1951
  %1970 = vst [vmem:[%s6 + $0x30] sm:$0xff] %v1956
  %1971 = vst [vmem:[%s6 + $0x38] sm:$0xff] %v1961
  // Predicated region
  $region30: #{sequence_model_forward.1} parent=0 // pred_check
    _
  $region31: #{sequence_model_forward.1} parent=0 // pred_check_branch
    %1973 = sbr.rel (0) target = $region33
  $region32: #{sequence_model_forward.1} parent=0 // pred_region
    _
  $region33: #{sequence_model_forward.1} parent=0 // pred_fallthru
    _
  // Predicated region
  $region34: #{sequence_model_forward.1} parent=0 // pred_check
    _
  $region35: #{sequence_model_forward.1} parent=0 // pred_check_branch
    %1975 = sbr.rel (0) target = $region37
  $region36: #{sequence_model_forward.1} parent=0 // pred_region
    _
  $region37: #{sequence_model_forward.1} parent=0 // pred_fallthru
    _

</llo_original>
